<compile_context>
chip_gen: v7x
topology: tpu7x:2x2x1
jax: 0.10.0
libtpu: 0.0.40
codegen_flags: <defaults>
</compile_context>

<pallas_src>
import math

import jax
import jax.numpy as jnp
from jax.experimental import pallas as pl
from jax.experimental.pallas import tpu as pltpu  # noqa: F401  (TPU backend assumed)

# ---------------- tiny-BERT config (synthetic, deterministic init) ----------------
VOCAB = 100
MAX_POS = 32
TYPE_VOCAB = 2
HIDDEN = 32
N_LAYERS = 2
N_HEADS = 2
HEAD_DIM = HIDDEN // N_HEADS
INTERMEDIATE = 64
BATCH = 2
SEQ = 8
LN_EPS = 1e-12
ATT_SCALE = 1.0 / math.sqrt(HEAD_DIM)


# ---------------- in-kernel helpers (traced inside the Pallas kernel) ----------------
def _layernorm(x, g, b):
    mean = jnp.mean(x, axis=-1, keepdims=True)
    xc = x - mean
    var = jnp.mean(xc * xc, axis=-1, keepdims=True)
    return xc * jax.lax.rsqrt(var + LN_EPS) * g + b


def _gelu(y):
    # TODO(synk): BERT's exact erf-GELU approximated with the tanh form (EUP-friendly).
    return 0.5 * y * (1.0 + jnp.tanh(0.7978845608028654 * (y + 0.044715 * y * (y * y))))


# ---------------- the single fused kernel ----------------
def _cross_encoder_kernel(
    emb_ref, bias_ref, cls_sel_ref,
    emb_ln_g_ref, emb_ln_b_ref,
    wqkv_ref, bqkv_ref, wo_ref, bo_ref,
    ln1_g_ref, ln1_b_ref,
    w1_ref, b1_ref, w2_ref, b2_ref,
    ln2_g_ref, ln2_b_ref,
    pool_w_ref, pool_b_ref, cls_w_ref, cls_b_ref,
    loss_ref,
):
    x = _layernorm(emb_ref[...], emb_ln_g_ref[...], emb_ln_b_ref[...])   # (B*S, H)
    bias = bias_ref[...]                                                  # (B*S, B*S)

    for l in range(N_LAYERS):   # static unroll: weights + activations stay in VMEM
        # ---- attention block: fused QKV (one MXU issue, lane-dense N = 3H) ----
        qkv = jnp.dot(x, wqkv_ref[l], preferred_element_type=jnp.float32) + bqkv_ref[l]
        wo = wo_ref[l]
        attn_out = jnp.zeros((BATCH * SEQ, HIDDEN), dtype=jnp.float32)
        for h in range(N_HEADS):          # static lane slices; all sequences batched
            lo = h * HEAD_DIM
            q = qkv[:, lo:lo + HEAD_DIM]
            k = qkv[:, HIDDEN + lo:HIDDEN + lo + HEAD_DIM]
            v = qkv[:, 2 * HIDDEN + lo:2 * HIDDEN + lo + HEAD_DIM]
            # (B*S, B*S) scores; cross-sequence pairs are killed exactly by the
            # block-diagonal additive bias (exp underflows to 0.0 in f32).
            scores = jax.lax.dot_general(
                q, k, (((1,), (1,)), ((), ())),
                preferred_element_type=jnp.float32) * ATT_SCALE + bias
            m = jnp.max(scores, axis=-1, keepdims=True)
            p = jnp.exp(scores - m)
            p = p / jnp.sum(p, axis=-1, keepdims=True)
            ctx = jnp.dot(p, v, preferred_element_type=jnp.float32)      # (B*S, dh)
            # head "merge" folded into a per-head slice of the output projection
            attn_out = attn_out + jnp.dot(ctx, wo[lo:lo + HEAD_DIM, :],
                                          preferred_element_type=jnp.float32)
        # residual add folded into the LayerNorm
        x = _layernorm(x + attn_out + bo_ref[l], ln1_g_ref[l], ln1_b_ref[l])

        # ---- FFN block ----
        h1 = _gelu(jnp.dot(x, w1_ref[l], preferred_element_type=jnp.float32) + b1_ref[l])
        h2 = jnp.dot(h1, w2_ref[l], preferred_element_type=jnp.float32) + b2_ref[l]
        x = _layernorm(x + h2, ln2_g_ref[l], ln2_b_ref[l])

    # ---- pooler (tanh) + classifier + listwise log_softmax / NLL(target=0), fused ----
    cls_rows = jnp.dot(cls_sel_ref[...], x,
                       preferred_element_type=jnp.float32)               # (B, H): [CLS] rows
    pooled = jnp.tanh(jnp.dot(cls_rows, pool_w_ref[...],
                              preferred_element_type=jnp.float32) + pool_b_ref[...])
    logits = jnp.dot(pooled, cls_w_ref[...],
                     preferred_element_type=jnp.float32) + cls_b_ref[...]  # (B, 1)
    # logits.permute(1,0) -> (1,B); log_softmax over the B documents; nll_loss(target=[0])
    m = jnp.max(logits, axis=0, keepdims=True)                             # (1, 1)
    lse = jnp.log(jnp.sum(jnp.exp(logits - m), axis=0, keepdims=True)) + m
    loss_ref[...] = lse - logits[0:1, 0:1]   # = -log_softmax(logits)[0]   (positive doc = row 0)


# ---------------- model wrapper (JAX glue: embedding gather + one pallas_call) ----------------
def cross_encoder_loss(packed, input_ids, input_mask, segment_ids):
    B, S = input_ids.shape
    assert B == BATCH and S == SEQ
    pos_ids = jnp.arange(S, dtype=jnp.int32)[None, :]
    # Embedding table lookups (irregular gather) stay in JAX; everything after is one kernel.
    emb = (packed["word_emb"][input_ids]
           + packed["pos_emb"][pos_ids]
           + packed["type_emb"][segment_ids]).reshape(B * S, HIDDEN)

    # Additive attention bias, precomputed once per forward (hoisted out of the kernel):
    # block-diagonal across the B sequences + HF BERT's (1 - mask) * -10000 padding bias.
    pad_bias = (1.0 - input_mask.astype(jnp.float32).reshape(-1)) * -10000.0   # (B*S,)
    seq_id = jnp.repeat(jnp.arange(B, dtype=jnp.int32), S)                     # (B*S,)
    same_seq = seq_id[:, None] == seq_id[None, :]
    attn_bias = jnp.where(same_seq, pad_bias[None, :], -10000.0)               # (B*S, B*S)

    # One-hot selector that extracts each sequence's [CLS] row via a 2-D matmul in-kernel.
    cls_sel = jax.nn.one_hot(jnp.arange(B) * S, B * S, dtype=jnp.float32)      # (B, B*S)

    loss = pl.pallas_call(
        _cross_encoder_kernel,
        out_shape=jax.ShapeDtypeStruct((1, 1), jnp.float32),
    )(emb, attn_bias, cls_sel,
      packed["emb_ln_g"], packed["emb_ln_b"],
      packed["wqkv"], packed["bqkv"], packed["wo"], packed["bo"],
      packed["ln1_g"], packed["ln1_b"],
      packed["w1"], packed["b1"], packed["w2"], packed["b2"],
      packed["ln2_g"], packed["ln2_b"],
      packed["pool_w"], packed["pool_b"], packed["cls_w"], packed["cls_b"])
    return loss[0, 0]


# ---------------- deterministic parameter init (mirrors the HF module layout) ----------------
def init_params(key):
    def norm(k, shape, scale=0.02):
        return scale * jax.random.normal(k, shape, dtype=jnp.float32)

    keys = iter(jax.random.split(key, 64))
    params = {
        "word_emb": norm(next(keys), (VOCAB, HIDDEN)),
        "pos_emb": norm(next(keys), (MAX_POS, HIDDEN)),
        "type_emb": norm(next(keys), (TYPE_VOCAB, HIDDEN)),
        "emb_ln_g": jnp.ones((HIDDEN,), jnp.float32),
        "emb_ln_b": jnp.zeros((HIDDEN,), jnp.float32),
        "pool_w": norm(next(keys), (HIDDEN, HIDDEN)),
        "pool_b": jnp.zeros((HIDDEN,), jnp.float32),
        "cls_w": norm(next(keys), (HIDDEN, 1)),
        "cls_b": jnp.zeros((1,), jnp.float32),
        "layers": [],
    }
    for _ in range(N_LAYERS):
        params["layers"].append({
            "wq": norm(next(keys), (HIDDEN, HIDDEN)), "bq": jnp.zeros((HIDDEN,), jnp.float32),
            "wk": norm(next(keys), (HIDDEN, HIDDEN)), "bk": jnp.zeros((HIDDEN,), jnp.float32),
            "wv": norm(next(keys), (HIDDEN, HIDDEN)), "bv": jnp.zeros((HIDDEN,), jnp.float32),
            "wo": norm(next(keys), (HIDDEN, HIDDEN)), "bo": jnp.zeros((HIDDEN,), jnp.float32),
            "ln1_g": jnp.ones((HIDDEN,), jnp.float32), "ln1_b": jnp.zeros((HIDDEN,), jnp.float32),
            "w1": norm(next(keys), (HIDDEN, INTERMEDIATE)), "b1": jnp.zeros((INTERMEDIATE,), jnp.float32),
            "w2": norm(next(keys), (INTERMEDIATE, HIDDEN)), "b2": jnp.zeros((HIDDEN,), jnp.float32),
            "ln2_g": jnp.ones((HIDDEN,), jnp.float32), "ln2_b": jnp.zeros((HIDDEN,), jnp.float32),
        })
    return params


def pack_params(params):
    """One-time packing: fuse wq|wk|wv, stack per-layer weights along a leading layer axis."""
    L = params["layers"]
    packed = {
        "word_emb": params["word_emb"],
        "pos_emb": params["pos_emb"],
        "type_emb": params["type_emb"],
        "emb_ln_g": params["emb_ln_g"].reshape(1, HIDDEN),
        "emb_ln_b": params["emb_ln_b"].reshape(1, HIDDEN),
        "wqkv": jnp.stack([jnp.concatenate([l["wq"], l["wk"], l["wv"]], axis=1) for l in L]),
        "bqkv": jnp.stack([jnp.concatenate([l["bq"], l["bk"], l["bv"]]).reshape(1, 3 * HIDDEN)
                           for l in L]),
        "wo": jnp.stack([l["wo"] for l in L]),
        "bo": jnp.stack([l["bo"].reshape(1, HIDDEN) for l in L]),
        "ln1_g": jnp.stack([l["ln1_g"].reshape(1, HIDDEN) for l in L]),
        "ln1_b": jnp.stack([l["ln1_b"].reshape(1, HIDDEN) for l in L]),
        "w1": jnp.stack([l["w1"] for l in L]),
        "b1": jnp.stack([l["b1"].reshape(1, INTERMEDIATE) for l in L]),
        "w2": jnp.stack([l["w2"] for l in L]),
        "b2": jnp.stack([l["b2"].reshape(1, HIDDEN) for l in L]),
        "ln2_g": jnp.stack([l["ln2_g"].reshape(1, HIDDEN) for l in L]),
        "ln2_b": jnp.stack([l["ln2_b"].reshape(1, HIDDEN) for l in L]),
        "pool_w": params["pool_w"],
        "pool_b": params["pool_b"].reshape(1, HIDDEN),
        "cls_w": params["cls_w"],
        "cls_b": params["cls_b"].reshape(1, 1),
    }
    return packed


if __name__ == "__main__":
    root = jax.random.PRNGKey(0)
    k_param, k_ids, k_seg = jax.random.split(root, 3)

    params = init_params(k_param)
    packed = pack_params(params)

    input_ids = jax.random.randint(k_ids, (BATCH, SEQ), 0, VOCAB, dtype=jnp.int32)
    segment_ids = jnp.concatenate(
        [jnp.zeros((BATCH, SEQ // 2), jnp.int32), jnp.ones((BATCH, SEQ // 2), jnp.int32)],
        axis=1)
    input_mask = jnp.ones((BATCH, SEQ), jnp.int32).at[1, SEQ - 2:].set(0)  # some padding in row 1

    loss_fn = jax.jit(cross_encoder_loss)
    loss = loss_fn(packed, input_ids, input_mask, segment_ids)
    jax.block_until_ready(loss)
    assert loss.shape == () and jnp.isfinite(loss)
    print("KERNEL_OK")
</pallas_src>

<mosaic_0001>
module attributes {stable_mosaic.version = 11 : i64} {
  func.func @_cross_encoder_kernel(%arg0: memref<16x32xf32, #tpu.memory_space<vmem>>, %arg1: memref<16x16xf32, #tpu.memory_space<vmem>>, %arg2: memref<2x16xf32, #tpu.memory_space<vmem>>, %arg3: memref<1x32xf32, #tpu.memory_space<vmem>>, %arg4: memref<1x32xf32, #tpu.memory_space<vmem>>, %arg5: memref<2x32x96xf32, #tpu.memory_space<vmem>>, %arg6: memref<2x1x96xf32, #tpu.memory_space<vmem>>, %arg7: memref<2x32x32xf32, #tpu.memory_space<vmem>>, %arg8: memref<2x1x32xf32, #tpu.memory_space<vmem>>, %arg9: memref<2x1x32xf32, #tpu.memory_space<vmem>>, %arg10: memref<2x1x32xf32, #tpu.memory_space<vmem>>, %arg11: memref<2x32x64xf32, #tpu.memory_space<vmem>>, %arg12: memref<2x1x64xf32, #tpu.memory_space<vmem>>, %arg13: memref<2x64x32xf32, #tpu.memory_space<vmem>>, %arg14: memref<2x1x32xf32, #tpu.memory_space<vmem>>, %arg15: memref<2x1x32xf32, #tpu.memory_space<vmem>>, %arg16: memref<2x1x32xf32, #tpu.memory_space<vmem>>, %arg17: memref<32x32xf32, #tpu.memory_space<vmem>>, %arg18: memref<1x32xf32, #tpu.memory_space<vmem>>, %arg19: memref<32x1xf32, #tpu.memory_space<vmem>>, %arg20: memref<1x1xf32, #tpu.memory_space<vmem>>, %arg21: memref<1x1xf32, #tpu.memory_space<vmem>>) attributes {dimension_semantics = [], scalar_prefetch = 0 : i64, scratch_operands = 0 : i64, tpu.core_type = #tpu.core_type<tc>} {
    %c0 = arith.constant 0 : index
    %c0_0 = arith.constant 0 : index
    %0 = vector.load %arg0[%c0, %c0_0] : memref<16x32xf32, #tpu.memory_space<vmem>>, vector<16x32xf32>
    %c0_1 = arith.constant 0 : index
    %c0_2 = arith.constant 0 : index
    %1 = vector.load %arg3[%c0_1, %c0_2] : memref<1x32xf32, #tpu.memory_space<vmem>>, vector<1x32xf32>
    %c0_3 = arith.constant 0 : index
    %c0_4 = arith.constant 0 : index
    %2 = vector.load %arg4[%c0_3, %c0_4] : memref<1x32xf32, #tpu.memory_space<vmem>>, vector<1x32xf32>
    %cst = arith.constant dense<0.000000e+00> : vector<16xf32>
    %3 = vector.multi_reduction <add>, %0, %cst [1] : vector<16x32xf32> to vector<16xf32>
    %4 = vector.shape_cast %3 : vector<16xf32> to vector<16x1xf32>
    %cst_5 = arith.constant 3.200000e+01 : f32
    %5 = vector.broadcast %cst_5 : f32 to vector<16x1xf32>
    %6 = arith.divf %4, %5 : vector<16x1xf32>
    %7 = vector.broadcast %6 : vector<16x1xf32> to vector<16x32xf32>
    %8 = arith.subf %0, %7 : vector<16x32xf32>
    %9 = arith.mulf %8, %8 : vector<16x32xf32>
    %cst_6 = arith.constant dense<0.000000e+00> : vector<16xf32>
    %10 = vector.multi_reduction <add>, %9, %cst_6 [1] : vector<16x32xf32> to vector<16xf32>
    %11 = vector.shape_cast %10 : vector<16xf32> to vector<16x1xf32>
    %cst_7 = arith.constant 3.200000e+01 : f32
    %12 = vector.broadcast %cst_7 : f32 to vector<16x1xf32>
    %13 = arith.divf %11, %12 : vector<16x1xf32>
    %cst_8 = arith.constant 9.99999996E-13 : f32
    %14 = vector.broadcast %cst_8 : f32 to vector<16x1xf32>
    %15 = arith.addf %13, %14 : vector<16x1xf32>
    %16 = math.rsqrt %15 : vector<16x1xf32>
    %17 = vector.broadcast %16 : vector<16x1xf32> to vector<16x32xf32>
    %18 = arith.mulf %8, %17 : vector<16x32xf32>
    %19 = vector.broadcast %1 : vector<1x32xf32> to vector<16x32xf32>
    %20 = arith.mulf %18, %19 : vector<16x32xf32>
    %21 = vector.broadcast %2 : vector<1x32xf32> to vector<16x32xf32>
    %22 = arith.addf %20, %21 : vector<16x32xf32>
    %c0_9 = arith.constant 0 : index
    %c0_10 = arith.constant 0 : index
    %23 = vector.load %arg1[%c0_9, %c0_10] : memref<16x16xf32, #tpu.memory_space<vmem>>, vector<16x16xf32>
    %c0_11 = arith.constant 0 : index
    %c0_12 = arith.constant 0 : index
    %c0_13 = arith.constant 0 : index
    %24 = vector.load %arg5[%c0_11, %c0_12, %c0_13] : memref<2x32x96xf32, #tpu.memory_space<vmem>>, vector<1x32x96xf32>
    %25 = vector.shape_cast %24 : vector<1x32x96xf32> to vector<32x96xf32>
    %cst_14 = arith.constant dense<0.000000e+00> : vector<16x96xf32>
    %26 = tpu.matmul %22, %25, %cst_14 {dimension_numbers = #tpu.dot_dimension_numbers<[1], [0], [0], [1], [0, 0, 1, 1], [], []>} : vector<16x32xf32>, vector<32x96xf32>, vector<16x96xf32> -> vector<16x96xf32>
    %c0_15 = arith.constant 0 : index
    %c0_16 = arith.constant 0 : index
    %c0_17 = arith.constant 0 : index
    %27 = vector.load %arg6[%c0_15, %c0_16, %c0_17] : memref<2x1x96xf32, #tpu.memory_space<vmem>>, vector<1x1x96xf32>
    %28 = vector.shape_cast %27 : vector<1x1x96xf32> to vector<1x96xf32>
    %29 = vector.broadcast %28 : vector<1x96xf32> to vector<16x96xf32>
    %30 = arith.addf %26, %29 : vector<16x96xf32>
    %c0_18 = arith.constant 0 : index
    %c0_19 = arith.constant 0 : index
    %c0_20 = arith.constant 0 : index
    %31 = vector.load %arg7[%c0_18, %c0_19, %c0_20] : memref<2x32x32xf32, #tpu.memory_space<vmem>>, vector<1x32x32xf32>
    %32 = vector.shape_cast %31 : vector<1x32x32xf32> to vector<32x32xf32>
    %cst_21 = arith.constant 0.000000e+00 : f32
    %33 = vector.broadcast %cst_21 : f32 to vector<16x32xf32>
    %34 = vector.extract_strided_slice %30 {offsets = [0, 0], sizes = [16, 16], strides = [1, 1]} : vector<16x96xf32> to vector<16x16xf32>
    %35 = vector.extract_strided_slice %30 {offsets = [0, 32], sizes = [16, 16], strides = [1, 1]} : vector<16x96xf32> to vector<16x16xf32>
    %36 = vector.extract_strided_slice %30 {offsets = [0, 64], sizes = [16, 16], strides = [1, 1]} : vector<16x96xf32> to vector<16x16xf32>
    %cst_22 = arith.constant dense<0.000000e+00> : vector<16x16xf32>
    %37 = tpu.matmul %34, %35, %cst_22 {dimension_numbers = #tpu.dot_dimension_numbers<[1], [1], [0], [0], [0, 0, 1, 0], [], []>} : vector<16x16xf32>, vector<16x16xf32>, vector<16x16xf32> -> vector<16x16xf32>
    %cst_23 = arith.constant 2.500000e-01 : f32
    %38 = vector.broadcast %cst_23 : f32 to vector<16x16xf32>
    %39 = arith.mulf %37, %38 : vector<16x16xf32>
    %40 = arith.addf %39, %23 : vector<16x16xf32>
    %cst_24 = arith.constant dense<0xFF800000> : vector<16xf32>
    %41 = vector.multi_reduction <maximumf>, %40, %cst_24 [1] : vector<16x16xf32> to vector<16xf32>
    %42 = vector.shape_cast %41 : vector<16xf32> to vector<16x1xf32>
    %43 = vector.broadcast %42 : vector<16x1xf32> to vector<16x16xf32>
    %44 = arith.subf %40, %43 : vector<16x16xf32>
    %45 = math.exp %44 : vector<16x16xf32>
    %cst_25 = arith.constant dense<0.000000e+00> : vector<16xf32>
    %46 = vector.multi_reduction <add>, %45, %cst_25 [1] : vector<16x16xf32> to vector<16xf32>
    %47 = vector.shape_cast %46 : vector<16xf32> to vector<16x1xf32>
    %48 = vector.broadcast %47 : vector<16x1xf32> to vector<16x16xf32>
    %49 = arith.divf %45, %48 : vector<16x16xf32>
    %cst_26 = arith.constant dense<0.000000e+00> : vector<16x16xf32>
    %50 = tpu.matmul %49, %36, %cst_26 {dimension_numbers = #tpu.dot_dimension_numbers<[1], [0], [0], [1], [0, 0, 1, 1], [], []>} : vector<16x16xf32>, vector<16x16xf32>, vector<16x16xf32> -> vector<16x16xf32>
    %51 = vector.extract_strided_slice %32 {offsets = [0, 0], sizes = [16, 32], strides = [1, 1]} : vector<32x32xf32> to vector<16x32xf32>
    %cst_27 = arith.constant dense<0.000000e+00> : vector<16x32xf32>
    %52 = tpu.matmul %50, %51, %cst_27 {dimension_numbers = #tpu.dot_dimension_numbers<[1], [0], [0], [1], [0, 0, 1, 1], [], []>} : vector<16x16xf32>, vector<16x32xf32>, vector<16x32xf32> -> vector<16x32xf32>
    %53 = arith.addf %33, %52 : vector<16x32xf32>
    %54 = vector.extract_strided_slice %30 {offsets = [0, 16], sizes = [16, 16], strides = [1, 1]} : vector<16x96xf32> to vector<16x16xf32>
    %55 = vector.extract_strided_slice %30 {offsets = [0, 48], sizes = [16, 16], strides = [1, 1]} : vector<16x96xf32> to vector<16x16xf32>
    %56 = vector.extract_strided_slice %30 {offsets = [0, 80], sizes = [16, 16], strides = [1, 1]} : vector<16x96xf32> to vector<16x16xf32>
    %cst_28 = arith.constant dense<0.000000e+00> : vector<16x16xf32>
    %57 = tpu.matmul %54, %55, %cst_28 {dimension_numbers = #tpu.dot_dimension_numbers<[1], [1], [0], [0], [0, 0, 1, 0], [], []>} : vector<16x16xf32>, vector<16x16xf32>, vector<16x16xf32> -> vector<16x16xf32>
    %cst_29 = arith.constant 2.500000e-01 : f32
    %58 = vector.broadcast %cst_29 : f32 to vector<16x16xf32>
    %59 = arith.mulf %57, %58 : vector<16x16xf32>
    %60 = arith.addf %59, %23 : vector<16x16xf32>
    %cst_30 = arith.constant dense<0xFF800000> : vector<16xf32>
    %61 = vector.multi_reduction <maximumf>, %60, %cst_30 [1] : vector<16x16xf32> to vector<16xf32>
    %62 = vector.shape_cast %61 : vector<16xf32> to vector<16x1xf32>
    %63 = vector.broadcast %62 : vector<16x1xf32> to vector<16x16xf32>
    %64 = arith.subf %60, %63 : vector<16x16xf32>
    %65 = math.exp %64 : vector<16x16xf32>
    %cst_31 = arith.constant dense<0.000000e+00> : vector<16xf32>
    %66 = vector.multi_reduction <add>, %65, %cst_31 [1] : vector<16x16xf32> to vector<16xf32>
    %67 = vector.shape_cast %66 : vector<16xf32> to vector<16x1xf32>
    %68 = vector.broadcast %67 : vector<16x1xf32> to vector<16x16xf32>
    %69 = arith.divf %65, %68 : vector<16x16xf32>
    %cst_32 = arith.constant dense<0.000000e+00> : vector<16x16xf32>
    %70 = tpu.matmul %69, %56, %cst_32 {dimension_numbers = #tpu.dot_dimension_numbers<[1], [0], [0], [1], [0, 0, 1, 1], [], []>} : vector<16x16xf32>, vector<16x16xf32>, vector<16x16xf32> -> vector<16x16xf32>
    %71 = vector.extract_strided_slice %32 {offsets = [16, 0], sizes = [16, 32], strides = [1, 1]} : vector<32x32xf32> to vector<16x32xf32>
    %cst_33 = arith.constant dense<0.000000e+00> : vector<16x32xf32>
    %72 = tpu.matmul %70, %71, %cst_33 {dimension_numbers = #tpu.dot_dimension_numbers<[1], [0], [0], [1], [0, 0, 1, 1], [], []>} : vector<16x16xf32>, vector<16x32xf32>, vector<16x32xf32> -> vector<16x32xf32>
    %73 = arith.addf %53, %72 : vector<16x32xf32>
    %74 = arith.addf %22, %73 : vector<16x32xf32>
    %c0_34 = arith.constant 0 : index
    %c0_35 = arith.constant 0 : index
    %c0_36 = arith.constant 0 : index
    %75 = vector.load %arg8[%c0_34, %c0_35, %c0_36] : memref<2x1x32xf32, #tpu.memory_space<vmem>>, vector<1x1x32xf32>
    %76 = vector.shape_cast %75 : vector<1x1x32xf32> to vector<1x32xf32>
    %77 = vector.broadcast %76 : vector<1x32xf32> to vector<16x32xf32>
    %78 = arith.addf %74, %77 : vector<16x32xf32>
    %c0_37 = arith.constant 0 : index
    %c0_38 = arith.constant 0 : index
    %c0_39 = arith.constant 0 : index
    %79 = vector.load %arg9[%c0_37, %c0_38, %c0_39] : memref<2x1x32xf32, #tpu.memory_space<vmem>>, vector<1x1x32xf32>
    %80 = vector.shape_cast %79 : vector<1x1x32xf32> to vector<1x32xf32>
    %c0_40 = arith.constant 0 : index
    %c0_41 = arith.constant 0 : index
    %c0_42 = arith.constant 0 : index
    %81 = vector.load %arg10[%c0_40, %c0_41, %c0_42] : memref<2x1x32xf32, #tpu.memory_space<vmem>>, vector<1x1x32xf32>
    %82 = vector.shape_cast %81 : vector<1x1x32xf32> to vector<1x32xf32>
    %cst_43 = arith.constant dense<0.000000e+00> : vector<16xf32>
    %83 = vector.multi_reduction <add>, %78, %cst_43 [1] : vector<16x32xf32> to vector<16xf32>
    %84 = vector.shape_cast %83 : vector<16xf32> to vector<16x1xf32>
    %cst_44 = arith.constant 3.200000e+01 : f32
    %85 = vector.broadcast %cst_44 : f32 to vector<16x1xf32>
    %86 = arith.divf %84, %85 : vector<16x1xf32>
    %87 = vector.broadcast %86 : vector<16x1xf32> to vector<16x32xf32>
    %88 = arith.subf %78, %87 : vector<16x32xf32>
    %89 = arith.mulf %88, %88 : vector<16x32xf32>
    %cst_45 = arith.constant dense<0.000000e+00> : vector<16xf32>
    %90 = vector.multi_reduction <add>, %89, %cst_45 [1] : vector<16x32xf32> to vector<16xf32>
    %91 = vector.shape_cast %90 : vector<16xf32> to vector<16x1xf32>
    %cst_46 = arith.constant 3.200000e+01 : f32
    %92 = vector.broadcast %cst_46 : f32 to vector<16x1xf32>
    %93 = arith.divf %91, %92 : vector<16x1xf32>
    %cst_47 = arith.constant 9.99999996E-13 : f32
    %94 = vector.broadcast %cst_47 : f32 to vector<16x1xf32>
    %95 = arith.addf %93, %94 : vector<16x1xf32>
    %96 = math.rsqrt %95 : vector<16x1xf32>
    %97 = vector.broadcast %96 : vector<16x1xf32> to vector<16x32xf32>
    %98 = arith.mulf %88, %97 : vector<16x32xf32>
    %99 = vector.broadcast %80 : vector<1x32xf32> to vector<16x32xf32>
    %100 = arith.mulf %98, %99 : vector<16x32xf32>
    %101 = vector.broadcast %82 : vector<1x32xf32> to vector<16x32xf32>
    %102 = arith.addf %100, %101 : vector<16x32xf32>
    %c0_48 = arith.constant 0 : index
    %c0_49 = arith.constant 0 : index
    %c0_50 = arith.constant 0 : index
    %103 = vector.load %arg11[%c0_48, %c0_49, %c0_50] : memref<2x32x64xf32, #tpu.memory_space<vmem>>, vector<1x32x64xf32>
    %104 = vector.shape_cast %103 : vector<1x32x64xf32> to vector<32x64xf32>
    %cst_51 = arith.constant dense<0.000000e+00> : vector<16x64xf32>
    %105 = tpu.matmul %102, %104, %cst_51 {dimension_numbers = #tpu.dot_dimension_numbers<[1], [0], [0], [1], [0, 0, 1, 1], [], []>} : vector<16x32xf32>, vector<32x64xf32>, vector<16x64xf32> -> vector<16x64xf32>
    %c0_52 = arith.constant 0 : index
    %c0_53 = arith.constant 0 : index
    %c0_54 = arith.constant 0 : index
    %106 = vector.load %arg12[%c0_52, %c0_53, %c0_54] : memref<2x1x64xf32, #tpu.memory_space<vmem>>, vector<1x1x64xf32>
    %107 = vector.shape_cast %106 : vector<1x1x64xf32> to vector<1x64xf32>
    %108 = vector.broadcast %107 : vector<1x64xf32> to vector<16x64xf32>
    %109 = arith.addf %105, %108 : vector<16x64xf32>
    %cst_55 = arith.constant 5.000000e-01 : f32
    %110 = vector.broadcast %cst_55 : f32 to vector<16x64xf32>
    %111 = arith.mulf %110, %109 : vector<16x64xf32>
    %cst_56 = arith.constant 4.471500e-02 : f32
    %112 = vector.broadcast %cst_56 : f32 to vector<16x64xf32>
    %113 = arith.mulf %112, %109 : vector<16x64xf32>
    %114 = arith.mulf %109, %109 : vector<16x64xf32>
    %115 = arith.mulf %113, %114 : vector<16x64xf32>
    %116 = arith.addf %109, %115 : vector<16x64xf32>
    %cst_57 = arith.constant 0.797884583 : f32
    %117 = vector.broadcast %cst_57 : f32 to vector<16x64xf32>
    %118 = arith.mulf %117, %116 : vector<16x64xf32>
    %119 = math.tanh %118 : vector<16x64xf32>
    %cst_58 = arith.constant 1.000000e+00 : f32
    %120 = vector.broadcast %cst_58 : f32 to vector<16x64xf32>
    %121 = arith.addf %120, %119 : vector<16x64xf32>
    %122 = arith.mulf %111, %121 : vector<16x64xf32>
    %c0_59 = arith.constant 0 : index
    %c0_60 = arith.constant 0 : index
    %c0_61 = arith.constant 0 : index
    %123 = vector.load %arg13[%c0_59, %c0_60, %c0_61] : memref<2x64x32xf32, #tpu.memory_space<vmem>>, vector<1x64x32xf32>
    %124 = vector.shape_cast %123 : vector<1x64x32xf32> to vector<64x32xf32>
    %cst_62 = arith.constant dense<0.000000e+00> : vector<16x32xf32>
    %125 = tpu.matmul %122, %124, %cst_62 {dimension_numbers = #tpu.dot_dimension_numbers<[1], [0], [0], [1], [0, 0, 1, 1], [], []>} : vector<16x64xf32>, vector<64x32xf32>, vector<16x32xf32> -> vector<16x32xf32>
    %c0_63 = arith.constant 0 : index
    %c0_64 = arith.constant 0 : index
    %c0_65 = arith.constant 0 : index
    %126 = vector.load %arg14[%c0_63, %c0_64, %c0_65] : memref<2x1x32xf32, #tpu.memory_space<vmem>>, vector<1x1x32xf32>
    %127 = vector.shape_cast %126 : vector<1x1x32xf32> to vector<1x32xf32>
    %128 = vector.broadcast %127 : vector<1x32xf32> to vector<16x32xf32>
    %129 = arith.addf %125, %128 : vector<16x32xf32>
    %130 = arith.addf %102, %129 : vector<16x32xf32>
    %c0_66 = arith.constant 0 : index
    %c0_67 = arith.constant 0 : index
    %c0_68 = arith.constant 0 : index
    %131 = vector.load %arg15[%c0_66, %c0_67, %c0_68] : memref<2x1x32xf32, #tpu.memory_space<vmem>>, vector<1x1x32xf32>
    %132 = vector.shape_cast %131 : vector<1x1x32xf32> to vector<1x32xf32>
    %c0_69 = arith.constant 0 : index
    %c0_70 = arith.constant 0 : index
    %c0_71 = arith.constant 0 : index
    %133 = vector.load %arg16[%c0_69, %c0_70, %c0_71] : memref<2x1x32xf32, #tpu.memory_space<vmem>>, vector<1x1x32xf32>
    %134 = vector.shape_cast %133 : vector<1x1x32xf32> to vector<1x32xf32>
    %cst_72 = arith.constant dense<0.000000e+00> : vector<16xf32>
    %135 = vector.multi_reduction <add>, %130, %cst_72 [1] : vector<16x32xf32> to vector<16xf32>
    %136 = vector.shape_cast %135 : vector<16xf32> to vector<16x1xf32>
    %cst_73 = arith.constant 3.200000e+01 : f32
    %137 = vector.broadcast %cst_73 : f32 to vector<16x1xf32>
    %138 = arith.divf %136, %137 : vector<16x1xf32>
    %139 = vector.broadcast %138 : vector<16x1xf32> to vector<16x32xf32>
    %140 = arith.subf %130, %139 : vector<16x32xf32>
    %141 = arith.mulf %140, %140 : vector<16x32xf32>
    %cst_74 = arith.constant dense<0.000000e+00> : vector<16xf32>
    %142 = vector.multi_reduction <add>, %141, %cst_74 [1] : vector<16x32xf32> to vector<16xf32>
    %143 = vector.shape_cast %142 : vector<16xf32> to vector<16x1xf32>
    %cst_75 = arith.constant 3.200000e+01 : f32
    %144 = vector.broadcast %cst_75 : f32 to vector<16x1xf32>
    %145 = arith.divf %143, %144 : vector<16x1xf32>
    %cst_76 = arith.constant 9.99999996E-13 : f32
    %146 = vector.broadcast %cst_76 : f32 to vector<16x1xf32>
    %147 = arith.addf %145, %146 : vector<16x1xf32>
    %148 = math.rsqrt %147 : vector<16x1xf32>
    %149 = vector.broadcast %148 : vector<16x1xf32> to vector<16x32xf32>
    %150 = arith.mulf %140, %149 : vector<16x32xf32>
    %151 = vector.broadcast %132 : vector<1x32xf32> to vector<16x32xf32>
    %152 = arith.mulf %150, %151 : vector<16x32xf32>
    %153 = vector.broadcast %134 : vector<1x32xf32> to vector<16x32xf32>
    %154 = arith.addf %152, %153 : vector<16x32xf32>
    %c1 = arith.constant 1 : index
    %c0_77 = arith.constant 0 : index
    %c0_78 = arith.constant 0 : index
    %155 = vector.load %arg5[%c1, %c0_77, %c0_78] : memref<2x32x96xf32, #tpu.memory_space<vmem>>, vector<1x32x96xf32>
    %156 = vector.shape_cast %155 : vector<1x32x96xf32> to vector<32x96xf32>
    %cst_79 = arith.constant dense<0.000000e+00> : vector<16x96xf32>
    %157 = tpu.matmul %154, %156, %cst_79 {dimension_numbers = #tpu.dot_dimension_numbers<[1], [0], [0], [1], [0, 0, 1, 1], [], []>} : vector<16x32xf32>, vector<32x96xf32>, vector<16x96xf32> -> vector<16x96xf32>
    %c1_80 = arith.constant 1 : index
    %c0_81 = arith.constant 0 : index
    %c0_82 = arith.constant 0 : index
    %158 = vector.load %arg6[%c1_80, %c0_81, %c0_82] : memref<2x1x96xf32, #tpu.memory_space<vmem>>, vector<1x1x96xf32>
    %159 = vector.shape_cast %158 : vector<1x1x96xf32> to vector<1x96xf32>
    %160 = vector.broadcast %159 : vector<1x96xf32> to vector<16x96xf32>
    %161 = arith.addf %157, %160 : vector<16x96xf32>
    %c1_83 = arith.constant 1 : index
    %c0_84 = arith.constant 0 : index
    %c0_85 = arith.constant 0 : index
    %162 = vector.load %arg7[%c1_83, %c0_84, %c0_85] : memref<2x32x32xf32, #tpu.memory_space<vmem>>, vector<1x32x32xf32>
    %163 = vector.shape_cast %162 : vector<1x32x32xf32> to vector<32x32xf32>
    %cst_86 = arith.constant 0.000000e+00 : f32
    %164 = vector.broadcast %cst_86 : f32 to vector<16x32xf32>
    %165 = vector.extract_strided_slice %161 {offsets = [0, 0], sizes = [16, 16], strides = [1, 1]} : vector<16x96xf32> to vector<16x16xf32>
    %166 = vector.extract_strided_slice %161 {offsets = [0, 32], sizes = [16, 16], strides = [1, 1]} : vector<16x96xf32> to vector<16x16xf32>
    %167 = vector.extract_strided_slice %161 {offsets = [0, 64], sizes = [16, 16], strides = [1, 1]} : vector<16x96xf32> to vector<16x16xf32>
    %cst_87 = arith.constant dense<0.000000e+00> : vector<16x16xf32>
    %168 = tpu.matmul %165, %166, %cst_87 {dimension_numbers = #tpu.dot_dimension_numbers<[1], [1], [0], [0], [0, 0, 1, 0], [], []>} : vector<16x16xf32>, vector<16x16xf32>, vector<16x16xf32> -> vector<16x16xf32>
    %cst_88 = arith.constant 2.500000e-01 : f32
    %169 = vector.broadcast %cst_88 : f32 to vector<16x16xf32>
    %170 = arith.mulf %168, %169 : vector<16x16xf32>
    %171 = arith.addf %170, %23 : vector<16x16xf32>
    %cst_89 = arith.constant dense<0xFF800000> : vector<16xf32>
    %172 = vector.multi_reduction <maximumf>, %171, %cst_89 [1] : vector<16x16xf32> to vector<16xf32>
    %173 = vector.shape_cast %172 : vector<16xf32> to vector<16x1xf32>
    %174 = vector.broadcast %173 : vector<16x1xf32> to vector<16x16xf32>
    %175 = arith.subf %171, %174 : vector<16x16xf32>
    %176 = math.exp %175 : vector<16x16xf32>
    %cst_90 = arith.constant dense<0.000000e+00> : vector<16xf32>
    %177 = vector.multi_reduction <add>, %176, %cst_90 [1] : vector<16x16xf32> to vector<16xf32>
    %178 = vector.shape_cast %177 : vector<16xf32> to vector<16x1xf32>
    %179 = vector.broadcast %178 : vector<16x1xf32> to vector<16x16xf32>
    %180 = arith.divf %176, %179 : vector<16x16xf32>
    %cst_91 = arith.constant dense<0.000000e+00> : vector<16x16xf32>
    %181 = tpu.matmul %180, %167, %cst_91 {dimension_numbers = #tpu.dot_dimension_numbers<[1], [0], [0], [1], [0, 0, 1, 1], [], []>} : vector<16x16xf32>, vector<16x16xf32>, vector<16x16xf32> -> vector<16x16xf32>
    %182 = vector.extract_strided_slice %163 {offsets = [0, 0], sizes = [16, 32], strides = [1, 1]} : vector<32x32xf32> to vector<16x32xf32>
    %cst_92 = arith.constant dense<0.000000e+00> : vector<16x32xf32>
    %183 = tpu.matmul %181, %182, %cst_92 {dimension_numbers = #tpu.dot_dimension_numbers<[1], [0], [0], [1], [0, 0, 1, 1], [], []>} : vector<16x16xf32>, vector<16x32xf32>, vector<16x32xf32> -> vector<16x32xf32>
    %184 = arith.addf %164, %183 : vector<16x32xf32>
    %185 = vector.extract_strided_slice %161 {offsets = [0, 16], sizes = [16, 16], strides = [1, 1]} : vector<16x96xf32> to vector<16x16xf32>
    %186 = vector.extract_strided_slice %161 {offsets = [0, 48], sizes = [16, 16], strides = [1, 1]} : vector<16x96xf32> to vector<16x16xf32>
    %187 = vector.extract_strided_slice %161 {offsets = [0, 80], sizes = [16, 16], strides = [1, 1]} : vector<16x96xf32> to vector<16x16xf32>
    %cst_93 = arith.constant dense<0.000000e+00> : vector<16x16xf32>
    %188 = tpu.matmul %185, %186, %cst_93 {dimension_numbers = #tpu.dot_dimension_numbers<[1], [1], [0], [0], [0, 0, 1, 0], [], []>} : vector<16x16xf32>, vector<16x16xf32>, vector<16x16xf32> -> vector<16x16xf32>
    %cst_94 = arith.constant 2.500000e-01 : f32
    %189 = vector.broadcast %cst_94 : f32 to vector<16x16xf32>
    %190 = arith.mulf %188, %189 : vector<16x16xf32>
    %191 = arith.addf %190, %23 : vector<16x16xf32>
    %cst_95 = arith.constant dense<0xFF800000> : vector<16xf32>
    %192 = vector.multi_reduction <maximumf>, %191, %cst_95 [1] : vector<16x16xf32> to vector<16xf32>
    %193 = vector.shape_cast %192 : vector<16xf32> to vector<16x1xf32>
    %194 = vector.broadcast %193 : vector<16x1xf32> to vector<16x16xf32>
    %195 = arith.subf %191, %194 : vector<16x16xf32>
    %196 = math.exp %195 : vector<16x16xf32>
    %cst_96 = arith.constant dense<0.000000e+00> : vector<16xf32>
    %197 = vector.multi_reduction <add>, %196, %cst_96 [1] : vector<16x16xf32> to vector<16xf32>
    %198 = vector.shape_cast %197 : vector<16xf32> to vector<16x1xf32>
    %199 = vector.broadcast %198 : vector<16x1xf32> to vector<16x16xf32>
    %200 = arith.divf %196, %199 : vector<16x16xf32>
    %cst_97 = arith.constant dense<0.000000e+00> : vector<16x16xf32>
    %201 = tpu.matmul %200, %187, %cst_97 {dimension_numbers = #tpu.dot_dimension_numbers<[1], [0], [0], [1], [0, 0, 1, 1], [], []>} : vector<16x16xf32>, vector<16x16xf32>, vector<16x16xf32> -> vector<16x16xf32>
    %202 = vector.extract_strided_slice %163 {offsets = [16, 0], sizes = [16, 32], strides = [1, 1]} : vector<32x32xf32> to vector<16x32xf32>
    %cst_98 = arith.constant dense<0.000000e+00> : vector<16x32xf32>
    %203 = tpu.matmul %201, %202, %cst_98 {dimension_numbers = #tpu.dot_dimension_numbers<[1], [0], [0], [1], [0, 0, 1, 1], [], []>} : vector<16x16xf32>, vector<16x32xf32>, vector<16x32xf32> -> vector<16x32xf32>
    %204 = arith.addf %184, %203 : vector<16x32xf32>
    %205 = arith.addf %154, %204 : vector<16x32xf32>
    %c1_99 = arith.constant 1 : index
    %c0_100 = arith.constant 0 : index
    %c0_101 = arith.constant 0 : index
    %206 = vector.load %arg8[%c1_99, %c0_100, %c0_101] : memref<2x1x32xf32, #tpu.memory_space<vmem>>, vector<1x1x32xf32>
    %207 = vector.shape_cast %206 : vector<1x1x32xf32> to vector<1x32xf32>
    %208 = vector.broadcast %207 : vector<1x32xf32> to vector<16x32xf32>
    %209 = arith.addf %205, %208 : vector<16x32xf32>
    %c1_102 = arith.constant 1 : index
    %c0_103 = arith.constant 0 : index
    %c0_104 = arith.constant 0 : index
    %210 = vector.load %arg9[%c1_102, %c0_103, %c0_104] : memref<2x1x32xf32, #tpu.memory_space<vmem>>, vector<1x1x32xf32>
    %211 = vector.shape_cast %210 : vector<1x1x32xf32> to vector<1x32xf32>
    %c1_105 = arith.constant 1 : index
    %c0_106 = arith.constant 0 : index
    %c0_107 = arith.constant 0 : index
    %212 = vector.load %arg10[%c1_105, %c0_106, %c0_107] : memref<2x1x32xf32, #tpu.memory_space<vmem>>, vector<1x1x32xf32>
    %213 = vector.shape_cast %212 : vector<1x1x32xf32> to vector<1x32xf32>
    %cst_108 = arith.constant dense<0.000000e+00> : vector<16xf32>
    %214 = vector.multi_reduction <add>, %209, %cst_108 [1] : vector<16x32xf32> to vector<16xf32>
    %215 = vector.shape_cast %214 : vector<16xf32> to vector<16x1xf32>
    %cst_109 = arith.constant 3.200000e+01 : f32
    %216 = vector.broadcast %cst_109 : f32 to vector<16x1xf32>
    %217 = arith.divf %215, %216 : vector<16x1xf32>
    %218 = vector.broadcast %217 : vector<16x1xf32> to vector<16x32xf32>
    %219 = arith.subf %209, %218 : vector<16x32xf32>
    %220 = arith.mulf %219, %219 : vector<16x32xf32>
    %cst_110 = arith.constant dense<0.000000e+00> : vector<16xf32>
    %221 = vector.multi_reduction <add>, %220, %cst_110 [1] : vector<16x32xf32> to vector<16xf32>
    %222 = vector.shape_cast %221 : vector<16xf32> to vector<16x1xf32>
    %cst_111 = arith.constant 3.200000e+01 : f32
    %223 = vector.broadcast %cst_111 : f32 to vector<16x1xf32>
    %224 = arith.divf %222, %223 : vector<16x1xf32>
    %cst_112 = arith.constant 9.99999996E-13 : f32
    %225 = vector.broadcast %cst_112 : f32 to vector<16x1xf32>
    %226 = arith.addf %224, %225 : vector<16x1xf32>
    %227 = math.rsqrt %226 : vector<16x1xf32>
    %228 = vector.broadcast %227 : vector<16x1xf32> to vector<16x32xf32>
    %229 = arith.mulf %219, %228 : vector<16x32xf32>
    %230 = vector.broadcast %211 : vector<1x32xf32> to vector<16x32xf32>
    %231 = arith.mulf %229, %230 : vector<16x32xf32>
    %232 = vector.broadcast %213 : vector<1x32xf32> to vector<16x32xf32>
    %233 = arith.addf %231, %232 : vector<16x32xf32>
    %c1_113 = arith.constant 1 : index
    %c0_114 = arith.constant 0 : index
    %c0_115 = arith.constant 0 : index
    %234 = vector.load %arg11[%c1_113, %c0_114, %c0_115] : memref<2x32x64xf32, #tpu.memory_space<vmem>>, vector<1x32x64xf32>
    %235 = vector.shape_cast %234 : vector<1x32x64xf32> to vector<32x64xf32>
    %cst_116 = arith.constant dense<0.000000e+00> : vector<16x64xf32>
    %236 = tpu.matmul %233, %235, %cst_116 {dimension_numbers = #tpu.dot_dimension_numbers<[1], [0], [0], [1], [0, 0, 1, 1], [], []>} : vector<16x32xf32>, vector<32x64xf32>, vector<16x64xf32> -> vector<16x64xf32>
    %c1_117 = arith.constant 1 : index
    %c0_118 = arith.constant 0 : index
    %c0_119 = arith.constant 0 : index
    %237 = vector.load %arg12[%c1_117, %c0_118, %c0_119] : memref<2x1x64xf32, #tpu.memory_space<vmem>>, vector<1x1x64xf32>
    %238 = vector.shape_cast %237 : vector<1x1x64xf32> to vector<1x64xf32>
    %239 = vector.broadcast %238 : vector<1x64xf32> to vector<16x64xf32>
    %240 = arith.addf %236, %239 : vector<16x64xf32>
    %cst_120 = arith.constant 5.000000e-01 : f32
    %241 = vector.broadcast %cst_120 : f32 to vector<16x64xf32>
    %242 = arith.mulf %241, %240 : vector<16x64xf32>
    %cst_121 = arith.constant 4.471500e-02 : f32
    %243 = vector.broadcast %cst_121 : f32 to vector<16x64xf32>
    %244 = arith.mulf %243, %240 : vector<16x64xf32>
    %245 = arith.mulf %240, %240 : vector<16x64xf32>
    %246 = arith.mulf %244, %245 : vector<16x64xf32>
    %247 = arith.addf %240, %246 : vector<16x64xf32>
    %cst_122 = arith.constant 0.797884583 : f32
    %248 = vector.broadcast %cst_122 : f32 to vector<16x64xf32>
    %249 = arith.mulf %248, %247 : vector<16x64xf32>
    %250 = math.tanh %249 : vector<16x64xf32>
    %cst_123 = arith.constant 1.000000e+00 : f32
    %251 = vector.broadcast %cst_123 : f32 to vector<16x64xf32>
    %252 = arith.addf %251, %250 : vector<16x64xf32>
    %253 = arith.mulf %242, %252 : vector<16x64xf32>
    %c1_124 = arith.constant 1 : index
    %c0_125 = arith.constant 0 : index
    %c0_126 = arith.constant 0 : index
    %254 = vector.load %arg13[%c1_124, %c0_125, %c0_126] : memref<2x64x32xf32, #tpu.memory_space<vmem>>, vector<1x64x32xf32>
    %255 = vector.shape_cast %254 : vector<1x64x32xf32> to vector<64x32xf32>
    %cst_127 = arith.constant dense<0.000000e+00> : vector<16x32xf32>
    %256 = tpu.matmul %253, %255, %cst_127 {dimension_numbers = #tpu.dot_dimension_numbers<[1], [0], [0], [1], [0, 0, 1, 1], [], []>} : vector<16x64xf32>, vector<64x32xf32>, vector<16x32xf32> -> vector<16x32xf32>
    %c1_128 = arith.constant 1 : index
    %c0_129 = arith.constant 0 : index
    %c0_130 = arith.constant 0 : index
    %257 = vector.load %arg14[%c1_128, %c0_129, %c0_130] : memref<2x1x32xf32, #tpu.memory_space<vmem>>, vector<1x1x32xf32>
    %258 = vector.shape_cast %257 : vector<1x1x32xf32> to vector<1x32xf32>
    %259 = vector.broadcast %258 : vector<1x32xf32> to vector<16x32xf32>
    %260 = arith.addf %256, %259 : vector<16x32xf32>
    %261 = arith.addf %233, %260 : vector<16x32xf32>
    %c1_131 = arith.constant 1 : index
    %c0_132 = arith.constant 0 : index
    %c0_133 = arith.constant 0 : index
    %262 = vector.load %arg15[%c1_131, %c0_132, %c0_133] : memref<2x1x32xf32, #tpu.memory_space<vmem>>, vector<1x1x32xf32>
    %263 = vector.shape_cast %262 : vector<1x1x32xf32> to vector<1x32xf32>
    %c1_134 = arith.constant 1 : index
    %c0_135 = arith.constant 0 : index
    %c0_136 = arith.constant 0 : index
    %264 = vector.load %arg16[%c1_134, %c0_135, %c0_136] : memref<2x1x32xf32, #tpu.memory_space<vmem>>, vector<1x1x32xf32>
    %265 = vector.shape_cast %264 : vector<1x1x32xf32> to vector<1x32xf32>
    %cst_137 = arith.constant dense<0.000000e+00> : vector<16xf32>
    %266 = vector.multi_reduction <add>, %261, %cst_137 [1] : vector<16x32xf32> to vector<16xf32>
    %267 = vector.shape_cast %266 : vector<16xf32> to vector<16x1xf32>
    %cst_138 = arith.constant 3.200000e+01 : f32
    %268 = vector.broadcast %cst_138 : f32 to vector<16x1xf32>
    %269 = arith.divf %267, %268 : vector<16x1xf32>
    %270 = vector.broadcast %269 : vector<16x1xf32> to vector<16x32xf32>
    %271 = arith.subf %261, %270 : vector<16x32xf32>
    %272 = arith.mulf %271, %271 : vector<16x32xf32>
    %cst_139 = arith.constant dense<0.000000e+00> : vector<16xf32>
    %273 = vector.multi_reduction <add>, %272, %cst_139 [1] : vector<16x32xf32> to vector<16xf32>
    %274 = vector.shape_cast %273 : vector<16xf32> to vector<16x1xf32>
    %cst_140 = arith.constant 3.200000e+01 : f32
    %275 = vector.broadcast %cst_140 : f32 to vector<16x1xf32>
    %276 = arith.divf %274, %275 : vector<16x1xf32>
    %cst_141 = arith.constant 9.99999996E-13 : f32
    %277 = vector.broadcast %cst_141 : f32 to vector<16x1xf32>
    %278 = arith.addf %276, %277 : vector<16x1xf32>
    %279 = math.rsqrt %278 : vector<16x1xf32>
    %280 = vector.broadcast %279 : vector<16x1xf32> to vector<16x32xf32>
    %281 = arith.mulf %271, %280 : vector<16x32xf32>
    %282 = vector.broadcast %263 : vector<1x32xf32> to vector<16x32xf32>
    %283 = arith.mulf %281, %282 : vector<16x32xf32>
    %284 = vector.broadcast %265 : vector<1x32xf32> to vector<16x32xf32>
    %285 = arith.addf %283, %284 : vector<16x32xf32>
    %c0_142 = arith.constant 0 : index
    %c0_143 = arith.constant 0 : index
    %286 = vector.load %arg2[%c0_142, %c0_143] : memref<2x16xf32, #tpu.memory_space<vmem>>, vector<2x16xf32>
    %cst_144 = arith.constant dense<0.000000e+00> : vector<2x32xf32>
    %287 = tpu.matmul %286, %285, %cst_144 {dimension_numbers = #tpu.dot_dimension_numbers<[1], [0], [0], [1], [0, 0, 1, 1], [], []>} : vector<2x16xf32>, vector<16x32xf32>, vector<2x32xf32> -> vector<2x32xf32>
    %c0_145 = arith.constant 0 : index
    %c0_146 = arith.constant 0 : index
    %288 = vector.load %arg17[%c0_145, %c0_146] : memref<32x32xf32, #tpu.memory_space<vmem>>, vector<32x32xf32>
    %cst_147 = arith.constant dense<0.000000e+00> : vector<2x32xf32>
    %289 = tpu.matmul %287, %288, %cst_147 {dimension_numbers = #tpu.dot_dimension_numbers<[1], [0], [0], [1], [0, 0, 1, 1], [], []>} : vector<2x32xf32>, vector<32x32xf32>, vector<2x32xf32> -> vector<2x32xf32>
    %c0_148 = arith.constant 0 : index
    %c0_149 = arith.constant 0 : index
    %290 = vector.load %arg18[%c0_148, %c0_149] : memref<1x32xf32, #tpu.memory_space<vmem>>, vector<1x32xf32>
    %291 = vector.broadcast %290 : vector<1x32xf32> to vector<2x32xf32>
    %292 = arith.addf %289, %291 : vector<2x32xf32>
    %293 = math.tanh %292 : vector<2x32xf32>
    %c0_150 = arith.constant 0 : index
    %c0_151 = arith.constant 0 : index
    %294 = vector.load %arg19[%c0_150, %c0_151] : memref<32x1xf32, #tpu.memory_space<vmem>>, vector<32x1xf32>
    %cst_152 = arith.constant dense<0.000000e+00> : vector<2x1xf32>
    %295 = tpu.matmul %293, %294, %cst_152 {dimension_numbers = #tpu.dot_dimension_numbers<[1], [0], [0], [1], [0, 0, 1, 1], [], []>} : vector<2x32xf32>, vector<32x1xf32>, vector<2x1xf32> -> vector<2x1xf32>
    %c0_153 = arith.constant 0 : index
    %c0_154 = arith.constant 0 : index
    %296 = vector.load %arg20[%c0_153, %c0_154] : memref<1x1xf32, #tpu.memory_space<vmem>>, vector<1x1xf32>
    %297 = vector.broadcast %296 : vector<1x1xf32> to vector<2x1xf32>
    %298 = arith.addf %295, %297 : vector<2x1xf32>
    %cst_155 = arith.constant dense<0xFF800000> : vector<1xf32>
    %299 = vector.multi_reduction <maximumf>, %298, %cst_155 [0] : vector<2x1xf32> to vector<1xf32>
    %300 = vector.shape_cast %299 : vector<1xf32> to vector<1x1xf32>
    %301 = vector.broadcast %300 : vector<1x1xf32> to vector<2x1xf32>
    %302 = arith.subf %298, %301 : vector<2x1xf32>
    %303 = math.exp %302 : vector<2x1xf32>
    %cst_156 = arith.constant dense<0.000000e+00> : vector<1xf32>
    %304 = vector.multi_reduction <add>, %303, %cst_156 [0] : vector<2x1xf32> to vector<1xf32>
    %305 = vector.shape_cast %304 : vector<1xf32> to vector<1x1xf32>
    %306 = math.log %305 : vector<1x1xf32>
    %307 = arith.addf %306, %300 : vector<1x1xf32>
    %308 = vector.extract_strided_slice %298 {offsets = [0, 0], sizes = [1, 1], strides = [1, 1]} : vector<2x1xf32> to vector<1x1xf32>
    %309 = arith.subf %307, %308 : vector<1x1xf32>
    %c0_157 = arith.constant 0 : index
    %c0_158 = arith.constant 0 : index
    %310 = vector.load %arg21[%c0_157, %c0_158] : memref<1x1xf32, #tpu.memory_space<vmem>>, vector<1x1xf32>
    tpu.vector_store %arg21[%c0_157, %c0_158], %309 {strides = array<i32>} : memref<1x1xf32, #tpu.memory_space<vmem>>, vector<1x1xf32>,
    return
  }
}

</mosaic_0001>

<llo_original>
// kernel: cross_encoder_loss.1
$region0: #{cross_encoder_loss.1}
  #allocation0 [shape = 'u32[]', space=smem, size = 0x4, offset = 0x4, fixed_abs, tag = 'smem constant byte address 0x4 - core index']
  #allocation1 [shape = 'u32[144,128]{1,0:T(1,128)}', space=vmem, size = 0x12000, scoped, tag = 'internal scratch']
  #allocation2 [shape = 'f32[1,1]{1,0:T(1,128)S(1)}', space=vmem, size = 0x200, scoped, tag = 'scoped memory for cross_encoder_loss.1']
  %s0 = inlined_call_operand.vmem [shape: f32[16,32], index: 0, kind: input, shape index: {}]
  %s1 = inlined_call_operand.vmem [shape: f32[16,16], index: 1, kind: input, shape index: {}]
  %s2 = inlined_call_operand.vmem [shape: f32[2,16], index: 2, kind: input, shape index: {}]
  %s3 = inlined_call_operand.vmem [shape: f32[1,32], index: 3, kind: input, shape index: {}]
  %s4 = inlined_call_operand.vmem [shape: f32[1,32], index: 4, kind: input, shape index: {}]
  %s5 = inlined_call_operand.vmem [shape: f32[2,32,96], index: 5, kind: input, shape index: {}]
  %s6 = inlined_call_operand.vmem [shape: f32[2,1,96], index: 6, kind: input, shape index: {}]
  %s7 = inlined_call_operand.vmem [shape: f32[2,32,32], index: 7, kind: input, shape index: {}]
  %s8 = inlined_call_operand.vmem [shape: f32[2,1,32], index: 8, kind: input, shape index: {}]
  %s9 = inlined_call_operand.vmem [shape: f32[2,1,32], index: 9, kind: input, shape index: {}]
  %s10 = inlined_call_operand.vmem [shape: f32[2,1,32], index: 10, kind: input, shape index: {}]
  %s11 = inlined_call_operand.vmem [shape: f32[2,32,64], index: 11, kind: input, shape index: {}]
  %s12 = inlined_call_operand.vmem [shape: f32[2,1,64], index: 12, kind: input, shape index: {}]
  %s13 = inlined_call_operand.vmem [shape: f32[2,64,32], index: 13, kind: input, shape index: {}]
  %s14 = inlined_call_operand.vmem [shape: f32[2,1,32], index: 14, kind: input, shape index: {}]
  %s15 = inlined_call_operand.vmem [shape: f32[2,1,32], index: 15, kind: input, shape index: {}]
  %s16 = inlined_call_operand.vmem [shape: f32[2,1,32], index: 16, kind: input, shape index: {}]
  %s17 = inlined_call_operand.vmem [shape: f32[32,32], index: 17, kind: input, shape index: {}]
  %s18 = inlined_call_operand.vmem [shape: f32[1,32], index: 18, kind: input, shape index: {}]
  %s19 = inlined_call_operand.vmem [shape: f32[32,1], index: 19, kind: input, shape index: {}]
  %s20 = inlined_call_operand.<no memory space> [shape: f32[1,1], index: 20, kind: input, shape index: {}]
  %s21 = inlined_call_operand.hbm [shape: f32[1,1], index: 21, kind: output, shape index: {}]
  %s22 = sld [smem:[#allocation0]]
  $region94: #{cross_encoder_loss.1} parent=0
    _
  %s24 = ssub.s32 1, %s22
  %s25 = scalar_select 0, %s24, %s22
  %v26 = vstv %s20
  %27 = vst [vmem:[#allocation2] sm:$0x1] %v26
  $region1: #{cross_encoder_loss.1} parent=0
    #allocation3 [shape = 'u8[512]{0}', space=vmem, size = 0x400, scoped, tag = 'output window, operand 0, single buffered']
    #allocation4 [shape = 's32[1]{0}', space=sflag, size = 0x4, scoped, tag = 'scoped memory for cross_encoder_loss.1']
    %28 = vsyncpa [#allocation4], 0
    // Predicated region
    $region2: #{cross_encoder_loss.1} parent=1 // pred_check
      _
    $region3: #{cross_encoder_loss.1} parent=1 // pred_check_branch
      %30 = sbr.rel (0) target = $region5
    $region4: #{cross_encoder_loss.1} parent=1 // pred_region
      _
    $region5: #{cross_encoder_loss.1} parent=1 // pred_fallthru
      _
    // Predicated region
    $region6: #{cross_encoder_loss.1} parent=1 // pred_check
      _
    $region7: #{cross_encoder_loss.1} parent=1 // pred_check_branch
      %32 = sbr.rel (0) target = $region9
    $region8: #{cross_encoder_loss.1} parent=1 // pred_region
      _
    $region9: #{cross_encoder_loss.1} parent=1 // pred_fallthru
      _
    // Predicated region
    $region10: #{cross_encoder_loss.1} parent=1 // pred_check
      _
    $region11: #{cross_encoder_loss.1} parent=1 // pred_check_branch
      %34 = sbr.rel (0) target = $region13
    $region12: #{cross_encoder_loss.1} parent=1 // pred_region
      _
    $region13: #{cross_encoder_loss.1} parent=1 // pred_fallthru
      _
    // Predicated region
    $region14: #{cross_encoder_loss.1} parent=1 // pred_check
      _
    $region15: #{cross_encoder_loss.1} parent=1 // pred_check_branch
      %36 = sbr.rel (0) target = $region17
    $region16: #{cross_encoder_loss.1} parent=1 // pred_region
      _
    $region17: #{cross_encoder_loss.1} parent=1 // pred_fallthru
      _
    // Predicated region
    $region18: #{cross_encoder_loss.1} parent=1 // pred_check
      _
    $region19: #{cross_encoder_loss.1} parent=1 // pred_check_branch
      %38 = sbr.rel (0) target = $region21
    $region20: #{cross_encoder_loss.1} parent=1 // pred_region
      _
    $region21: #{cross_encoder_loss.1} parent=1 // pred_fallthru
      _
    // Predicated region
    $region22: #{cross_encoder_loss.1} parent=1 // pred_check
      _
    $region23: #{cross_encoder_loss.1} parent=1 // pred_check_branch
      %40 = sbr.rel (0) target = $region25
    $region24: #{cross_encoder_loss.1} parent=1 // pred_region
      _
    $region25: #{cross_encoder_loss.1} parent=1 // pred_fallthru
      _
    // Predicated region
    $region26: #{cross_encoder_loss.1} parent=1 // pred_check
      _
    $region27: #{cross_encoder_loss.1} parent=1 // pred_check_branch
      %42 = sbr.rel (0) target = $region29
    $region28: #{cross_encoder_loss.1} parent=1 // pred_region
      _
    $region29: #{cross_encoder_loss.1} parent=1 // pred_fallthru
      _
    // Predicated region
    $region30: #{cross_encoder_loss.1} parent=1 // pred_check
      _
    $region31: #{cross_encoder_loss.1} parent=1 // pred_check_branch
      %44 = sbr.rel (0) target = $region33
    $region32: #{cross_encoder_loss.1} parent=1 // pred_region
      _
    $region33: #{cross_encoder_loss.1} parent=1 // pred_fallthru
      _
    // Predicated region
    $region34: #{cross_encoder_loss.1} parent=1 // pred_check
      _
    $region35: #{cross_encoder_loss.1} parent=1 // pred_check_branch
      %46 = sbr.rel (0) target = $region37
    $region36: #{cross_encoder_loss.1} parent=1 // pred_region
      _
    $region37: #{cross_encoder_loss.1} parent=1 // pred_fallthru
      _
    // Predicated region
    $region38: #{cross_encoder_loss.1} parent=1 // pred_check
      _
    $region39: #{cross_encoder_loss.1} parent=1 // pred_check_branch
      %48 = sbr.rel (0) target = $region41
    $region40: #{cross_encoder_loss.1} parent=1 // pred_region
      _
    $region41: #{cross_encoder_loss.1} parent=1 // pred_fallthru
      _
    // Predicated region
    $region42: #{cross_encoder_loss.1} parent=1 // pred_check
      _
    $region43: #{cross_encoder_loss.1} parent=1 // pred_check_branch
      %50 = sbr.rel (0) target = $region45
    $region44: #{cross_encoder_loss.1} parent=1 // pred_region
      _
    $region45: #{cross_encoder_loss.1} parent=1 // pred_fallthru
      _
    // Predicated region
    $region46: #{cross_encoder_loss.1} parent=1 // pred_check
      _
    $region47: #{cross_encoder_loss.1} parent=1 // pred_check_branch
      %52 = sbr.rel (0) target = $region49
    $region48: #{cross_encoder_loss.1} parent=1 // pred_region
      _
    $region49: #{cross_encoder_loss.1} parent=1 // pred_fallthru
      _
    // Predicated region
    $region50: #{cross_encoder_loss.1} parent=1 // pred_check
      _
    $region51: #{cross_encoder_loss.1} parent=1 // pred_check_branch
      %54 = sbr.rel (0) target = $region53
    $region52: #{cross_encoder_loss.1} parent=1 // pred_region
      _
    $region53: #{cross_encoder_loss.1} parent=1 // pred_fallthru
      _
    // Predicated region
    $region54: #{cross_encoder_loss.1} parent=1 // pred_check
      _
    $region55: #{cross_encoder_loss.1} parent=1 // pred_check_branch
      %56 = sbr.rel (0) target = $region57
    $region56: #{cross_encoder_loss.1} parent=1 // pred_region
      _
    $region57: #{cross_encoder_loss.1} parent=1 // pred_fallthru
      _
    // Predicated region
    $region58: #{cross_encoder_loss.1} parent=1 // pred_check
      _
    $region59: #{cross_encoder_loss.1} parent=1 // pred_check_branch
      %58 = sbr.rel (0) target = $region61
    $region60: #{cross_encoder_loss.1} parent=1 // pred_region
      _
    $region61: #{cross_encoder_loss.1} parent=1 // pred_fallthru
      _
    // Predicated region
    $region62: #{cross_encoder_loss.1} parent=1 // pred_check
      _
    $region63: #{cross_encoder_loss.1} parent=1 // pred_check_branch
      %60 = sbr.rel (0) target = $region65
    $region64: #{cross_encoder_loss.1} parent=1 // pred_region
      _
    $region65: #{cross_encoder_loss.1} parent=1 // pred_fallthru
      _
    // Predicated region
    $region66: #{cross_encoder_loss.1} parent=1 // pred_check
      _
    $region67: #{cross_encoder_loss.1} parent=1 // pred_check_branch
      %62 = sbr.rel (0) target = $region69
    $region68: #{cross_encoder_loss.1} parent=1 // pred_region
      _
    $region69: #{cross_encoder_loss.1} parent=1 // pred_fallthru
      _
    // Predicated region
    $region70: #{cross_encoder_loss.1} parent=1 // pred_check
      _
    $region71: #{cross_encoder_loss.1} parent=1 // pred_check_branch
      %64 = sbr.rel (0) target = $region73
    $region72: #{cross_encoder_loss.1} parent=1 // pred_region
      _
    $region73: #{cross_encoder_loss.1} parent=1 // pred_fallthru
      _
    // Predicated region
    $region74: #{cross_encoder_loss.1} parent=1 // pred_check
      _
    $region75: #{cross_encoder_loss.1} parent=1 // pred_check_branch
      %66 = sbr.rel (0) target = $region77
    $region76: #{cross_encoder_loss.1} parent=1 // pred_region
      _
    $region77: #{cross_encoder_loss.1} parent=1 // pred_fallthru
      _
    // Predicated region
    $region78: #{cross_encoder_loss.1} parent=1 // pred_check
      _
    $region79: #{cross_encoder_loss.1} parent=1 // pred_check_branch
      %68 = sbr.rel (0) target = $region81
    $region80: #{cross_encoder_loss.1} parent=1 // pred_region
      _
    $region81: #{cross_encoder_loss.1} parent=1 // pred_fallthru
      _
    // Predicated region
    $region82: #{cross_encoder_loss.1} parent=1 // pred_check
      _
    $region83: #{cross_encoder_loss.1} parent=1 // pred_check_branch
      %70 = sbr.rel (0) target = $region85
    $region84: #{cross_encoder_loss.1} parent=1 // pred_region
      _
    $region85: #{cross_encoder_loss.1} parent=1 // pred_fallthru
      _
    %v71 = vld [vmem:[%s0] sm:$0xff]
    %v72 = vld [vmem:[%s0 + $0x8] sm:$0xff]
    %v73 = vld [vmem:[%s3] sm:$0x1]
    %v74 = vld [vmem:[%s4] sm:$0x1]
    %vm75 = vcmask 261120
    %v76 = vsel %vm75, %v71, 0.0
    %77 = vadd.xlane.f32.xlu0 %v76
    %v78 = vpop.xlane.xlu0 %77
    %v79 = vsel %vm75, %v72, 0.0
    %80 = vadd.xlane.f32.xlu0 %v79
    %v81 = vpop.xlane.xlu0 %80
    %v82 = vrcp.pop 32.0
    %v83 = vmul.f32 %v78, %v82
    %v84 = vmul.f32 %v81, %v82
    %v85 = vsub.f32 %v71, %v83
    %v86 = vsub.f32 %v72, %v84
    %v87 = vmul.f32 %v85, %v85
    %v88 = vmul.f32 %v86, %v86
    %v89 = vsel %vm75, %v87, 0.0
    %90 = vadd.xlane.f32.xlu0 %v89
    %v91 = vpop.xlane.xlu0 %90
    %v92 = vsel %vm75, %v88, 0.0
    %93 = vadd.xlane.f32.xlu0 %v92
    %v94 = vpop.xlane.xlu0 %93
    %v95 = vmul.f32 %v91, %v82
    %v96 = vmul.f32 %v94, %v82
    %v97 = vadd.f32 %v95, 1e-12
    %v98 = vadd.f32 %v96, 1e-12
    %v99 = vrsqrt.pop %v97
    %v100 = vrsqrt.pop %v98
    %v101 = vmul.f32 %v85, %v99
    %v102 = vmul.f32 %v86, %v100
    %v104 = vlaneseq
    %v105 = vshrl.u32 %v104, 7
    %v106 = vsub.s32 0, %v105
    %v107 = vrot.slane %v73, %v106
    %v109 = vmul.f32 %v101, %v107
    %v110 = vmul.f32 %v102, %v107
    %v112 = vlaneseq
    %v113 = vshrl.u32 %v112, 7
    %v114 = vsub.s32 0, %v113
    %v115 = vrot.slane %v74, %v114
    %v117 = vadd.f32 %v109, %v115
    %v118 = vadd.f32 %v110, %v115
    %v119 = vld [vmem:[%s1] sm:$0xff]
    %v120 = vld [vmem:[%s1 + $0x8] sm:$0xff]
    %v121 = vld [vmem:[%s5] sm:$0xff]
    %v122 = vld [vmem:[%s5 + $0x8] sm:$0xff]
    %v123 = vld [vmem:[%s5 + $0x10] sm:$0xff]
    %v124 = vld [vmem:[%s5 + $0x18] sm:$0xff]
    %v125 = vld [vmem:[%s6] sm:$0x1]
    %v127 = vlaneseq
    %v128 = vshrl.u32 %v127, 7
    %v129 = vsub.s32 0, %v128
    %v130 = vrot.slane %v125, %v129
    %v133 = vsel %vm75, %v117, 0
    %v136 = vsel %vm75, %v118, 0
    %138 = vmatprep.subr.mxu0 0.0
    %139 = vmatpush1.msra.mxu0 %v121
    %140 = vmatprep.subr.mxu0 0.0
    %141 = vmatpush1.msra.mxu0 %v122
    %142 = vmatprep.subr.mxu0 0.0
    %143 = vmatpush1.msra.mxu0 %v123
    %144 = vmatprep.subr.mxu0 0.0
    %145 = vmatpush1.msra.mxu0 %v124
    %146 = vmatprep.subr.mxu0 0.0
    %147 = vmatpush1.msra.mxu0 0.0
    %148 = vmatprep.subr.mxu0 0.0
    %149 = vmatpush1.msra.mxu0 0.0
    %150 = vmatprep.subr.mxu0 0.0
    %151 = vmatpush1.msra.mxu0 0.0
    %152 = vmatprep.subr.mxu0 0.0
    %153 = vmatpush1.msra.mxu0 0.0
    %154 = vmatprep.subr.mxu0 0.0
    %155 = vmatpush1.msra.mxu0 0.0
    %156 = vmatprep.subr.mxu0 0.0
    %157 = vmatpush1.msra.mxu0 0.0
    %158 = vmatprep.subr.mxu0 0.0
    %159 = vmatpush1.msra.mxu0 0.0
    %160 = vmatprep.subr.mxu0 0.0
    %161 = vmatpush1.msra.mxu0 0.0
    %162 = vmatprep.subr.mxu0 0.0
    %163 = vmatpush1.msra.mxu0 0.0
    %164 = vmatprep.subr.mxu0 0.0
    %165 = vmatpush1.msra.mxu0 0.0
    %166 = vmatprep.subr.mxu0 0.0
    %167 = vmatpush1.msra.mxu0 0.0
    %168 = vmatprep.subr.mxu0 0.0
    %169 = vmatpush1.msra.mxu0 0.0
    %170 = vmatprep.subr.mxu0 0.0
    %171 = vmatpush1.msra.mxu0 0.0
    %172 = vmatprep.subr.mxu0 0.0
    %173 = vmatpush1.msra.mxu0 0.0
    %174 = vmatprep.subr.mxu0 0.0
    %175 = vmatpush1.msra.mxu0 0.0
    %176 = vmatprep.subr.mxu0 0.0
    %177 = vmatpush1.msra.mxu0 0.0
    %178 = vmatprep.subr.mxu0 0.0
    %179 = vmatpush1.msra.mxu0 0.0
    %180 = vmatprep.subr.mxu0 0.0
    %181 = vmatpush1.msra.mxu0 0.0
    %182 = vmatprep.subr.mxu0 0.0
    %183 = vmatpush1.msra.mxu0 0.0
    %184 = vmatprep.subr.mxu0 0.0
    %185 = vmatpush1.msra.mxu0 0.0
    %186 = vmatprep.subr.mxu0 0.0
    %187 = vmatpush1.msra.mxu0 0.0
    %188 = vmatprep.subr.mxu0 0.0
    %189 = vmatpush1.msra.mxu0 0.0
    %190 = vmatprep.subr.mxu0 0.0
    %191 = vmatpush1.msra.mxu0 0.0
    %192 = vmatprep.subr.mxu0 0.0
    %193 = vmatpush1.msra.mxu0 0.0
    %194 = vmatprep.subr.mxu0 0.0
    %195 = vmatpush1.msra.mxu0 0.0
    %196 = vmatprep.subr.mxu0 0.0
    %197 = vmatpush1.msra.mxu0 0.0
    %198 = vmatprep.subr.mxu0 0.0
    %199 = vmatpush1.msra.mxu0 0.0
    %200 = vmatprep.subr.mxu0 0.0
    %201 = vmatpush1.msra.mxu0 0.0
    %202 = vmatprep.mubr.f32.mxu0 0.0
    %203 = vmatmul.mubr.f32.gmra.mrb[0].mxu0 %v133
    %v204 = vpop.f32.mrb[0].mxu0
    %v205 = vadd.f32 %v130, %v204
    %v206 = vpop.f32.mrb[0].mxu0
    %207 = vmatprep.mubr.f32.mxu0 0.0
    %208 = vmatmul.mubr.f32.gmra.mrb[0].mxu0 %v136
    %v209 = vpop.f32.mrb[0].mxu0
    %v210 = vadd.f32 %v130, %v209
    %v211 = vpop.f32.mrb[0].mxu0
    %212 = vdwg.mxu0
    %v213 = vld [vmem:[%s7] sm:$0xff]
    %v214 = vld [vmem:[%s7 + $0x8] sm:$0xff]
    %v215 = vld [vmem:[%s7 + $0x10] sm:$0xff]
    %v216 = vld [vmem:[%s7 + $0x18] sm:$0xff]
    %219 = vrot.lane.b32.xlu0 %v205, 96
    %v220 = vpop.permute.xlu0 %219
    %221 = vrot.lane.b32.xlu0 %v210, 96
    %v222 = vpop.permute.xlu0 %221
    %vm223 = vcmask 130048
    %v224 = vsel %vm223, %v205, 0
    %v226 = vsel %vm223, %v210, 0
    %v228 = vsel %vm223, %v220, 0
    %v230 = vsel %vm223, %v222, 0
    %232 = vmatprep.subr.mxu0 0.0
    %233 = vmatpush1.xpose.msra.mxu0 %v228
    %234 = vmatprep.subr.mxu0 0.0
    %235 = vmatpush1.xpose.msra.mxu0 %v230
    %236 = vmatprep.subr.mxu0 0.0
    %237 = vmatpush1.xpose.msra.mxu0 0.0
    %238 = vmatprep.subr.mxu0 0.0
    %239 = vmatpush1.xpose.msra.mxu0 0.0
    %240 = vmatprep.subr.mxu0 0.0
    %241 = vmatpush1.xpose.msra.mxu0 0.0
    %242 = vmatprep.subr.mxu0 0.0
    %243 = vmatpush1.xpose.msra.mxu0 0.0
    %244 = vmatprep.subr.mxu0 0.0
    %245 = vmatpush1.xpose.msra.mxu0 0.0
    %246 = vmatprep.subr.mxu0 0.0
    %247 = vmatpush1.xpose.msra.mxu0 0.0
    %248 = vmatprep.subr.mxu0 0.0
    %249 = vmatpush1.xpose.msra.mxu0 0.0
    %250 = vmatprep.subr.mxu0 0.0
    %251 = vmatpush1.xpose.msra.mxu0 0.0
    %252 = vmatprep.subr.mxu0 0.0
    %253 = vmatpush1.xpose.msra.mxu0 0.0
    %254 = vmatprep.subr.mxu0 0.0
    %255 = vmatpush1.xpose.msra.mxu0 0.0
    %256 = vmatprep.subr.mxu0 0.0
    %257 = vmatpush1.xpose.msra.mxu0 0.0
    %258 = vmatprep.subr.mxu0 0.0
    %259 = vmatpush1.xpose.msra.mxu0 0.0
    %260 = vmatprep.subr.mxu0 0.0
    %261 = vmatpush1.xpose.msra.mxu0 0.0
    %262 = vmatprep.subr.mxu0 0.0
    %263 = vmatpush1.xpose.msra.mxu0 0.0
    %264 = vmatprep.subr.mxu0 0.0
    %265 = vmatpush1.xpose.msra.mxu0 0.0
    %266 = vmatprep.subr.mxu0 0.0
    %267 = vmatpush1.xpose.msra.mxu0 0.0
    %268 = vmatprep.subr.mxu0 0.0
    %269 = vmatpush1.xpose.msra.mxu0 0.0
    %270 = vmatprep.subr.mxu0 0.0
    %271 = vmatpush1.xpose.msra.mxu0 0.0
    %272 = vmatprep.subr.mxu0 0.0
    %273 = vmatpush1.xpose.msra.mxu0 0.0
    %274 = vmatprep.subr.mxu0 0.0
    %275 = vmatpush1.xpose.msra.mxu0 0.0
    %276 = vmatprep.subr.mxu0 0.0
    %277 = vmatpush1.xpose.msra.mxu0 0.0
    %278 = vmatprep.subr.mxu0 0.0
    %279 = vmatpush1.xpose.msra.mxu0 0.0
    %280 = vmatprep.subr.mxu0 0.0
    %281 = vmatpush1.xpose.msra.mxu0 0.0
    %282 = vmatprep.subr.mxu0 0.0
    %283 = vmatpush1.xpose.msra.mxu0 0.0
    %284 = vmatprep.subr.mxu0 0.0
    %285 = vmatpush1.xpose.msra.mxu0 0.0
    %286 = vmatprep.subr.mxu0 0.0
    %287 = vmatpush1.xpose.msra.mxu0 0.0
    %288 = vmatprep.subr.mxu0 0.0
    %289 = vmatpush1.xpose.msra.mxu0 0.0
    %290 = vmatprep.subr.mxu0 0.0
    %291 = vmatpush1.xpose.msra.mxu0 0.0
    %292 = vmatprep.subr.mxu0 0.0
    %293 = vmatpush1.xpose.msra.mxu0 0.0
    %294 = vmatprep.subr.mxu0 0.0
    %295 = vmatpush1.xpose.msra.mxu0 0.0
    %296 = vmatprep.mubr.f32.mxu0 0.0
    %297 = vmatmul.mubr.f32.gmra.mrb[0].mxu0 %v224
    %v298 = vpop.f32.mrb[0].mxu0
    %v299 = vadd.f32 0.0, %v298
    %v300 = vpop.f32.mrb[0].mxu0
    %301 = vmatprep.mubr.f32.mxu0 0.0
    %302 = vmatmul.mubr.f32.gmra.mrb[0].mxu0 %v226
    %v303 = vpop.f32.mrb[0].mxu0
    %v304 = vadd.f32 0.0, %v303
    %v305 = vpop.f32.mrb[0].mxu0
    %306 = vdwg.mxu0
    %v307 = vmul.f32 %v299, 0.25
    %v308 = vmul.f32 %v304, 0.25
    %v309 = vadd.f32 %v307, %v119
    %v310 = vadd.f32 %v308, %v120
    %v311 = vsel %vm223, %v309, -inf
    %312 = vmax.xlane.f32.xlu0 %v311
    %v313 = vpop.xlane.xlu0 %312
    %v314 = vsel %vm223, %v310, -inf
    %315 = vmax.xlane.f32.xlu0 %v314
    %v316 = vpop.xlane.xlu0 %315
    %v317 = vsub.f32 %v309, %v313
    %v318 = vsub.f32 %v310, %v316
    %v319 = vmul.f32 %v317, 1.442695
    %v320 = vpow.pop %v319
    %v321 = vmul.f32 %v318, 1.442695
    %v322 = vpow.pop %v321
    %v323 = vsel %vm223, %v320, 0.0
    %324 = vadd.xlane.f32.xlu0 %v323
    %v325 = vpop.xlane.xlu0 %324
    %v326 = vsel %vm223, %v322, 0.0
    %327 = vadd.xlane.f32.xlu0 %v326
    %v328 = vpop.xlane.xlu0 %327
    %v329 = vrcp.pop %v325
    %v330 = vmul.f32 %v320, %v329
    %v331 = vrcp.pop %v328
    %v332 = vmul.f32 %v322, %v331
    %333 = vrot.lane.b32.xlu0 %v205, 64
    %v334 = vpop.permute.xlu0 %333
    %335 = vrot.lane.b32.xlu0 %v210, 64
    %v336 = vpop.permute.xlu0 %335
    %v340 = vsel %vm223, %v330, 0
    %v343 = vsel %vm223, %v332, 0
    %345 = vmatprep.subr.mxu0 0.0
    %346 = vmatpush1.msra.mxu0 %v334
    %347 = vmatprep.subr.mxu0 0.0
    %348 = vmatpush1.msra.mxu0 %v336
    %349 = vmatprep.subr.mxu0 0.0
    %350 = vmatpush1.msra.mxu0 0.0
    %351 = vmatprep.subr.mxu0 0.0
    %352 = vmatpush1.msra.mxu0 0.0
    %353 = vmatprep.subr.mxu0 0.0
    %354 = vmatpush1.msra.mxu0 0.0
    %355 = vmatprep.subr.mxu0 0.0
    %356 = vmatpush1.msra.mxu0 0.0
    %357 = vmatprep.subr.mxu0 0.0
    %358 = vmatpush1.msra.mxu0 0.0
    %359 = vmatprep.subr.mxu0 0.0
    %360 = vmatpush1.msra.mxu0 0.0
    %361 = vmatprep.subr.mxu0 0.0
    %362 = vmatpush1.msra.mxu0 0.0
    %363 = vmatprep.subr.mxu0 0.0
    %364 = vmatpush1.msra.mxu0 0.0
    %365 = vmatprep.subr.mxu0 0.0
    %366 = vmatpush1.msra.mxu0 0.0
    %367 = vmatprep.subr.mxu0 0.0
    %368 = vmatpush1.msra.mxu0 0.0
    %369 = vmatprep.subr.mxu0 0.0
    %370 = vmatpush1.msra.mxu0 0.0
    %371 = vmatprep.subr.mxu0 0.0
    %372 = vmatpush1.msra.mxu0 0.0
    %373 = vmatprep.subr.mxu0 0.0
    %374 = vmatpush1.msra.mxu0 0.0
    %375 = vmatprep.subr.mxu0 0.0
    %376 = vmatpush1.msra.mxu0 0.0
    %377 = vmatprep.subr.mxu0 0.0
    %378 = vmatpush1.msra.mxu0 0.0
    %379 = vmatprep.subr.mxu0 0.0
    %380 = vmatpush1.msra.mxu0 0.0
    %381 = vmatprep.subr.mxu0 0.0
    %382 = vmatpush1.msra.mxu0 0.0
    %383 = vmatprep.subr.mxu0 0.0
    %384 = vmatpush1.msra.mxu0 0.0
    %385 = vmatprep.subr.mxu0 0.0
    %386 = vmatpush1.msra.mxu0 0.0
    %387 = vmatprep.subr.mxu0 0.0
    %388 = vmatpush1.msra.mxu0 0.0
    %389 = vmatprep.subr.mxu0 0.0
    %390 = vmatpush1.msra.mxu0 0.0
    %391 = vmatprep.subr.mxu0 0.0
    %392 = vmatpush1.msra.mxu0 0.0
    %393 = vmatprep.subr.mxu0 0.0
    %394 = vmatpush1.msra.mxu0 0.0
    %395 = vmatprep.subr.mxu0 0.0
    %396 = vmatpush1.msra.mxu0 0.0
    %397 = vmatprep.subr.mxu0 0.0
    %398 = vmatpush1.msra.mxu0 0.0
    %399 = vmatprep.subr.mxu0 0.0
    %400 = vmatpush1.msra.mxu0 0.0
    %401 = vmatprep.subr.mxu0 0.0
    %402 = vmatpush1.msra.mxu0 0.0
    %403 = vmatprep.subr.mxu0 0.0
    %404 = vmatpush1.msra.mxu0 0.0
    %405 = vmatprep.subr.mxu0 0.0
    %406 = vmatpush1.msra.mxu0 0.0
    %407 = vmatprep.subr.mxu0 0.0
    %408 = vmatpush1.msra.mxu0 0.0
    %409 = vmatprep.mubr.f32.mxu0 0.0
    %410 = vmatmul.mubr.f32.gmra.mrb[0].mxu0 %v340
    %v411 = vpop.f32.mrb[0].mxu0
    %v412 = vadd.f32 0.0, %v411
    %v413 = vpop.f32.mrb[0].mxu0
    %414 = vmatprep.mubr.f32.mxu0 0.0
    %415 = vmatmul.mubr.f32.gmra.mrb[0].mxu0 %v343
    %v416 = vpop.f32.mrb[0].mxu0
    %v417 = vadd.f32 0.0, %v416
    %v418 = vpop.f32.mrb[0].mxu0
    %419 = vdwg.mxu0
    %420 = vrot.lane.b32.xlu0 %v205, 112
    %v421 = vpop.permute.xlu0 %420
    %422 = vrot.lane.b32.xlu0 %v210, 112
    %v423 = vpop.permute.xlu0 %422
    %424 = vrot.lane.b32.xlu0 %v205, 80
    %v425 = vpop.permute.xlu0 %424
    %426 = vrot.lane.b32.xlu0 %v210, 80
    %v427 = vpop.permute.xlu0 %426
    %v428 = vsel %vm223, %v421, 0
    %v430 = vsel %vm223, %v423, 0
    %v432 = vsel %vm223, %v425, 0
    %v434 = vsel %vm223, %v427, 0
    %436 = vmatprep.subr.mxu0 0.0
    %437 = vmatpush1.xpose.msra.mxu0 %v432
    %438 = vmatprep.subr.mxu0 0.0
    %439 = vmatpush1.xpose.msra.mxu0 %v434
    %440 = vmatprep.subr.mxu0 0.0
    %441 = vmatpush1.xpose.msra.mxu0 0.0
    %442 = vmatprep.subr.mxu0 0.0
    %443 = vmatpush1.xpose.msra.mxu0 0.0
    %444 = vmatprep.subr.mxu0 0.0
    %445 = vmatpush1.xpose.msra.mxu0 0.0
    %446 = vmatprep.subr.mxu0 0.0
    %447 = vmatpush1.xpose.msra.mxu0 0.0
    %448 = vmatprep.subr.mxu0 0.0
    %449 = vmatpush1.xpose.msra.mxu0 0.0
    %450 = vmatprep.subr.mxu0 0.0
    %451 = vmatpush1.xpose.msra.mxu0 0.0
    %452 = vmatprep.subr.mxu0 0.0
    %453 = vmatpush1.xpose.msra.mxu0 0.0
    %454 = vmatprep.subr.mxu0 0.0
    %455 = vmatpush1.xpose.msra.mxu0 0.0
    %456 = vmatprep.subr.mxu0 0.0
    %457 = vmatpush1.xpose.msra.mxu0 0.0
    %458 = vmatprep.subr.mxu0 0.0
    %459 = vmatpush1.xpose.msra.mxu0 0.0
    %460 = vmatprep.subr.mxu0 0.0
    %461 = vmatpush1.xpose.msra.mxu0 0.0
    %462 = vmatprep.subr.mxu0 0.0
    %463 = vmatpush1.xpose.msra.mxu0 0.0
    %464 = vmatprep.subr.mxu0 0.0
    %465 = vmatpush1.xpose.msra.mxu0 0.0
    %466 = vmatprep.subr.mxu0 0.0
    %467 = vmatpush1.xpose.msra.mxu0 0.0
    %468 = vmatprep.subr.mxu0 0.0
    %469 = vmatpush1.xpose.msra.mxu0 0.0
    %470 = vmatprep.subr.mxu0 0.0
    %471 = vmatpush1.xpose.msra.mxu0 0.0
    %472 = vmatprep.subr.mxu0 0.0
    %473 = vmatpush1.xpose.msra.mxu0 0.0
    %474 = vmatprep.subr.mxu0 0.0
    %475 = vmatpush1.xpose.msra.mxu0 0.0
    %476 = vmatprep.subr.mxu0 0.0
    %477 = vmatpush1.xpose.msra.mxu0 0.0
    %478 = vmatprep.subr.mxu0 0.0
    %479 = vmatpush1.xpose.msra.mxu0 0.0
    %480 = vmatprep.subr.mxu0 0.0
    %481 = vmatpush1.xpose.msra.mxu0 0.0
    %482 = vmatprep.subr.mxu0 0.0
    %483 = vmatpush1.xpose.msra.mxu0 0.0
    %484 = vmatprep.subr.mxu0 0.0
    %485 = vmatpush1.xpose.msra.mxu0 0.0
    %486 = vmatprep.subr.mxu0 0.0
    %487 = vmatpush1.xpose.msra.mxu0 0.0
    %488 = vmatprep.subr.mxu0 0.0
    %489 = vmatpush1.xpose.msra.mxu0 0.0
    %490 = vmatprep.subr.mxu0 0.0
    %491 = vmatpush1.xpose.msra.mxu0 0.0
    %492 = vmatprep.subr.mxu0 0.0
    %493 = vmatpush1.xpose.msra.mxu0 0.0
    %494 = vmatprep.subr.mxu0 0.0
    %495 = vmatpush1.xpose.msra.mxu0 0.0
    %496 = vmatprep.subr.mxu0 0.0
    %497 = vmatpush1.xpose.msra.mxu0 0.0
    %498 = vmatprep.subr.mxu0 0.0
    %499 = vmatpush1.xpose.msra.mxu0 0.0
    %500 = vmatprep.mubr.f32.mxu0 0.0
    %501 = vmatmul.mubr.f32.gmra.mrb[0].mxu0 %v428
    %v502 = vpop.f32.mrb[0].mxu0
    %v503 = vadd.f32 0.0, %v502
    %v504 = vpop.f32.mrb[0].mxu0
    %505 = vmatprep.mubr.f32.mxu0 0.0
    %506 = vmatmul.mubr.f32.gmra.mrb[0].mxu0 %v430
    %v507 = vpop.f32.mrb[0].mxu0
    %v508 = vadd.f32 0.0, %v507
    %v509 = vpop.f32.mrb[0].mxu0
    %510 = vdwg.mxu0
    %v511 = vmul.f32 %v503, 0.25
    %v512 = vmul.f32 %v508, 0.25
    %v513 = vadd.f32 %v511, %v119
    %v514 = vadd.f32 %v512, %v120
    %v515 = vsel %vm223, %v513, -inf
    %516 = vmax.xlane.f32.xlu0 %v515
    %v517 = vpop.xlane.xlu0 %516
    %v518 = vsel %vm223, %v514, -inf
    %519 = vmax.xlane.f32.xlu0 %v518
    %v520 = vpop.xlane.xlu0 %519
    %v521 = vsub.f32 %v513, %v517
    %v522 = vsub.f32 %v514, %v520
    %v523 = vmul.f32 %v521, 1.442695
    %v524 = vpow.pop %v523
    %v525 = vmul.f32 %v522, 1.442695
    %v526 = vpow.pop %v525
    %v527 = vsel %vm223, %v524, 0.0
    %528 = vadd.xlane.f32.xlu0 %v527
    %v529 = vpop.xlane.xlu0 %528
    %v530 = vsel %vm223, %v526, 0.0
    %531 = vadd.xlane.f32.xlu0 %v530
    %v532 = vpop.xlane.xlu0 %531
    %v533 = vrcp.pop %v529
    %v534 = vmul.f32 %v524, %v533
    %v535 = vrcp.pop %v532
    %v536 = vmul.f32 %v526, %v535
    %537 = vrot.lane.b32.xlu0 %v205, 48
    %v538 = vpop.permute.xlu0 %537
    %539 = vrot.lane.b32.xlu0 %v210, 48
    %v540 = vpop.permute.xlu0 %539
    %v544 = vsel %vm223, %v534, 0
    %v547 = vsel %vm223, %v536, 0
    %549 = vmatprep.subr.mxu0 0.0
    %550 = vmatpush1.msra.mxu0 %v538
    %551 = vmatprep.subr.mxu0 0.0
    %552 = vmatpush1.msra.mxu0 %v540
    %553 = vmatprep.subr.mxu0 0.0
    %554 = vmatpush1.msra.mxu0 0.0
    %555 = vmatprep.subr.mxu0 0.0
    %556 = vmatpush1.msra.mxu0 0.0
    %557 = vmatprep.subr.mxu0 0.0
    %558 = vmatpush1.msra.mxu0 0.0
    %559 = vmatprep.subr.mxu0 0.0
    %560 = vmatpush1.msra.mxu0 0.0
    %561 = vmatprep.subr.mxu0 0.0
    %562 = vmatpush1.msra.mxu0 0.0
    %563 = vmatprep.subr.mxu0 0.0
    %564 = vmatpush1.msra.mxu0 0.0
    %565 = vmatprep.subr.mxu0 0.0
    %566 = vmatpush1.msra.mxu0 0.0
    %567 = vmatprep.subr.mxu0 0.0
    %568 = vmatpush1.msra.mxu0 0.0
    %569 = vmatprep.subr.mxu0 0.0
    %570 = vmatpush1.msra.mxu0 0.0
    %571 = vmatprep.subr.mxu0 0.0
    %572 = vmatpush1.msra.mxu0 0.0
    %573 = vmatprep.subr.mxu0 0.0
    %574 = vmatpush1.msra.mxu0 0.0
    %575 = vmatprep.subr.mxu0 0.0
    %576 = vmatpush1.msra.mxu0 0.0
    %577 = vmatprep.subr.mxu0 0.0
    %578 = vmatpush1.msra.mxu0 0.0
    %579 = vmatprep.subr.mxu0 0.0
    %580 = vmatpush1.msra.mxu0 0.0
    %581 = vmatprep.subr.mxu0 0.0
    %582 = vmatpush1.msra.mxu0 0.0
    %583 = vmatprep.subr.mxu0 0.0
    %584 = vmatpush1.msra.mxu0 0.0
    %585 = vmatprep.subr.mxu0 0.0
    %586 = vmatpush1.msra.mxu0 0.0
    %587 = vmatprep.subr.mxu0 0.0
    %588 = vmatpush1.msra.mxu0 0.0
    %589 = vmatprep.subr.mxu0 0.0
    %590 = vmatpush1.msra.mxu0 0.0
    %591 = vmatprep.subr.mxu0 0.0
    %592 = vmatpush1.msra.mxu0 0.0
    %593 = vmatprep.subr.mxu0 0.0
    %594 = vmatpush1.msra.mxu0 0.0
    %595 = vmatprep.subr.mxu0 0.0
    %596 = vmatpush1.msra.mxu0 0.0
    %597 = vmatprep.subr.mxu0 0.0
    %598 = vmatpush1.msra.mxu0 0.0
    %599 = vmatprep.subr.mxu0 0.0
    %600 = vmatpush1.msra.mxu0 0.0
    %601 = vmatprep.subr.mxu0 0.0
    %602 = vmatpush1.msra.mxu0 0.0
    %603 = vmatprep.subr.mxu0 0.0
    %604 = vmatpush1.msra.mxu0 0.0
    %605 = vmatprep.subr.mxu0 0.0
    %606 = vmatpush1.msra.mxu0 0.0
    %607 = vmatprep.subr.mxu0 0.0
    %608 = vmatpush1.msra.mxu0 0.0
    %609 = vmatprep.subr.mxu0 0.0
    %610 = vmatpush1.msra.mxu0 0.0
    %611 = vmatprep.subr.mxu0 0.0
    %612 = vmatpush1.msra.mxu0 0.0
    %613 = vmatprep.mubr.f32.mxu0 0.0
    %614 = vmatmul.mubr.f32.gmra.mrb[0].mxu0 %v544
    %v615 = vpop.f32.mrb[0].mxu0
    %v616 = vadd.f32 0.0, %v615
    %v617 = vpop.f32.mrb[0].mxu0
    %618 = vmatprep.mubr.f32.mxu0 0.0
    %619 = vmatmul.mubr.f32.gmra.mrb[0].mxu0 %v547
    %v620 = vpop.f32.mrb[0].mxu0
    %v621 = vadd.f32 0.0, %v620
    %v622 = vpop.f32.mrb[0].mxu0
    %623 = vdwg.mxu0
    %v625 = vsel %vm223, %v616, 0
    %v628 = vsel %vm223, %v621, 0
    %630 = vmatprep.subr.mxu0 0.0
    %631 = vmatpush1.msra.mxu0 %v215
    %632 = vmatprep.subr.mxu0 0.0
    %633 = vmatpush1.msra.mxu0 %v216
    %634 = vmatprep.subr.mxu0 0.0
    %635 = vmatpush1.msra.mxu0 0.0
    %636 = vmatprep.subr.mxu0 0.0
    %637 = vmatpush1.msra.mxu0 0.0
    %638 = vmatprep.subr.mxu0 0.0
    %639 = vmatpush1.msra.mxu0 0.0
    %640 = vmatprep.subr.mxu0 0.0
    %641 = vmatpush1.msra.mxu0 0.0
    %642 = vmatprep.subr.mxu0 0.0
    %643 = vmatpush1.msra.mxu0 0.0
    %644 = vmatprep.subr.mxu0 0.0
    %645 = vmatpush1.msra.mxu0 0.0
    %646 = vmatprep.subr.mxu0 0.0
    %647 = vmatpush1.msra.mxu0 0.0
    %648 = vmatprep.subr.mxu0 0.0
    %649 = vmatpush1.msra.mxu0 0.0
    %650 = vmatprep.subr.mxu0 0.0
    %651 = vmatpush1.msra.mxu0 0.0
    %652 = vmatprep.subr.mxu0 0.0
    %653 = vmatpush1.msra.mxu0 0.0
    %654 = vmatprep.subr.mxu0 0.0
    %655 = vmatpush1.msra.mxu0 0.0
    %656 = vmatprep.subr.mxu0 0.0
    %657 = vmatpush1.msra.mxu0 0.0
    %658 = vmatprep.subr.mxu0 0.0
    %659 = vmatpush1.msra.mxu0 0.0
    %660 = vmatprep.subr.mxu0 0.0
    %661 = vmatpush1.msra.mxu0 0.0
    %662 = vmatprep.subr.mxu0 0.0
    %663 = vmatpush1.msra.mxu0 0.0
    %664 = vmatprep.subr.mxu0 0.0
    %665 = vmatpush1.msra.mxu0 0.0
    %666 = vmatprep.subr.mxu0 0.0
    %667 = vmatpush1.msra.mxu0 0.0
    %668 = vmatprep.subr.mxu0 0.0
    %669 = vmatpush1.msra.mxu0 0.0
    %670 = vmatprep.subr.mxu0 0.0
    %671 = vmatpush1.msra.mxu0 0.0
    %672 = vmatprep.subr.mxu0 0.0
    %673 = vmatpush1.msra.mxu0 0.0
    %674 = vmatprep.subr.mxu0 0.0
    %675 = vmatpush1.msra.mxu0 0.0
    %676 = vmatprep.subr.mxu0 0.0
    %677 = vmatpush1.msra.mxu0 0.0
    %678 = vmatprep.subr.mxu0 0.0
    %679 = vmatpush1.msra.mxu0 0.0
    %680 = vmatprep.subr.mxu0 0.0
    %681 = vmatpush1.msra.mxu0 0.0
    %682 = vmatprep.subr.mxu0 0.0
    %683 = vmatpush1.msra.mxu0 0.0
    %684 = vmatprep.subr.mxu0 0.0
    %685 = vmatpush1.msra.mxu0 0.0
    %686 = vmatprep.subr.mxu0 0.0
    %687 = vmatpush1.msra.mxu0 0.0
    %688 = vmatprep.subr.mxu0 0.0
    %689 = vmatpush1.msra.mxu0 0.0
    %690 = vmatprep.subr.mxu0 0.0
    %691 = vmatpush1.msra.mxu0 0.0
    %692 = vmatprep.subr.mxu0 0.0
    %693 = vmatpush1.msra.mxu0 0.0
    %694 = vmatprep.mubr.f32.mxu0 0.0
    %695 = vmatmul.mubr.f32.gmra.mrb[0].mxu0 %v625
    %v696 = vpop.f32.mrb[0].mxu0
    %v697 = vadd.f32 0.0, %v696
    %v698 = vpop.f32.mrb[0].mxu0
    %699 = vmatprep.mubr.f32.mxu0 0.0
    %700 = vmatmul.mubr.f32.gmra.mrb[0].mxu0 %v628
    %v701 = vpop.f32.mrb[0].mxu0
    %v702 = vadd.f32 0.0, %v701
    %v703 = vpop.f32.mrb[0].mxu0
    %704 = vdwg.mxu0
    %v706 = vsel %vm223, %v412, 0
    %v709 = vsel %vm223, %v417, 0
    %711 = vmatprep.subr.mxu0 0.0
    %712 = vmatpush1.msra.mxu0 %v213
    %713 = vmatprep.subr.mxu0 0.0
    %714 = vmatpush1.msra.mxu0 %v214
    %715 = vmatprep.subr.mxu0 0.0
    %716 = vmatpush1.msra.mxu0 0.0
    %717 = vmatprep.subr.mxu0 0.0
    %718 = vmatpush1.msra.mxu0 0.0
    %719 = vmatprep.subr.mxu0 0.0
    %720 = vmatpush1.msra.mxu0 0.0
    %721 = vmatprep.subr.mxu0 0.0
    %722 = vmatpush1.msra.mxu0 0.0
    %723 = vmatprep.subr.mxu0 0.0
    %724 = vmatpush1.msra.mxu0 0.0
    %725 = vmatprep.subr.mxu0 0.0
    %726 = vmatpush1.msra.mxu0 0.0
    %727 = vmatprep.subr.mxu0 0.0
    %728 = vmatpush1.msra.mxu0 0.0
    %729 = vmatprep.subr.mxu0 0.0
    %730 = vmatpush1.msra.mxu0 0.0
    %731 = vmatprep.subr.mxu0 0.0
    %732 = vmatpush1.msra.mxu0 0.0
    %733 = vmatprep.subr.mxu0 0.0
    %734 = vmatpush1.msra.mxu0 0.0
    %735 = vmatprep.subr.mxu0 0.0
    %736 = vmatpush1.msra.mxu0 0.0
    %737 = vmatprep.subr.mxu0 0.0
    %738 = vmatpush1.msra.mxu0 0.0
    %739 = vmatprep.subr.mxu0 0.0
    %740 = vmatpush1.msra.mxu0 0.0
    %741 = vmatprep.subr.mxu0 0.0
    %742 = vmatpush1.msra.mxu0 0.0
    %743 = vmatprep.subr.mxu0 0.0
    %744 = vmatpush1.msra.mxu0 0.0
    %745 = vmatprep.subr.mxu0 0.0
    %746 = vmatpush1.msra.mxu0 0.0
    %747 = vmatprep.subr.mxu0 0.0
    %748 = vmatpush1.msra.mxu0 0.0
    %749 = vmatprep.subr.mxu0 0.0
    %750 = vmatpush1.msra.mxu0 0.0
    %751 = vmatprep.subr.mxu0 0.0
    %752 = vmatpush1.msra.mxu0 0.0
    %753 = vmatprep.subr.mxu0 0.0
    %754 = vmatpush1.msra.mxu0 0.0
    %755 = vmatprep.subr.mxu0 0.0
    %756 = vmatpush1.msra.mxu0 0.0
    %757 = vmatprep.subr.mxu0 0.0
    %758 = vmatpush1.msra.mxu0 0.0
    %759 = vmatprep.subr.mxu0 0.0
    %760 = vmatpush1.msra.mxu0 0.0
    %761 = vmatprep.subr.mxu0 0.0
    %762 = vmatpush1.msra.mxu0 0.0
    %763 = vmatprep.subr.mxu0 0.0
    %764 = vmatpush1.msra.mxu0 0.0
    %765 = vmatprep.subr.mxu0 0.0
    %766 = vmatpush1.msra.mxu0 0.0
    %767 = vmatprep.subr.mxu0 0.0
    %768 = vmatpush1.msra.mxu0 0.0
    %769 = vmatprep.subr.mxu0 0.0
    %770 = vmatpush1.msra.mxu0 0.0
    %771 = vmatprep.subr.mxu0 0.0
    %772 = vmatpush1.msra.mxu0 0.0
    %773 = vmatprep.subr.mxu0 0.0
    %774 = vmatpush1.msra.mxu0 0.0
    %775 = vmatprep.mubr.f32.mxu0 0.0
    %776 = vmatmul.mubr.f32.gmra.mrb[0].mxu0 %v706
    %v777 = vpop.f32.mrb[0].mxu0
    %v778 = vadd.f32 %v697, %v777
    %v779 = vpop.f32.mrb[0].mxu0
    %780 = vmatprep.mubr.f32.mxu0 0.0
    %781 = vmatmul.mubr.f32.gmra.mrb[0].mxu0 %v709
    %v782 = vpop.f32.mrb[0].mxu0
    %v783 = vadd.f32 %v702, %v782
    %v784 = vpop.f32.mrb[0].mxu0
    %785 = vdwg.mxu0
    %v786 = vadd.f32 %v117, %v778
    %v787 = vadd.f32 %v118, %v783
    %v788 = vld [vmem:[%s8] sm:$0x1]
    %v790 = vlaneseq
    %v791 = vshrl.u32 %v790, 7
    %v792 = vsub.s32 0, %v791
    %v793 = vrot.slane %v788, %v792
    %v795 = vadd.f32 %v786, %v793
    %v796 = vadd.f32 %v787, %v793
    %v797 = vld [vmem:[%s9] sm:$0x1]
    %v798 = vld [vmem:[%s10] sm:$0x1]
    %v799 = vsel %vm75, %v795, 0.0
    %800 = vadd.xlane.f32.xlu0 %v799
    %v801 = vpop.xlane.xlu0 %800
    %v802 = vsel %vm75, %v796, 0.0
    %803 = vadd.xlane.f32.xlu0 %v802
    %v804 = vpop.xlane.xlu0 %803
    %v805 = vmul.f32 %v801, %v82
    %v806 = vmul.f32 %v804, %v82
    %v807 = vsub.f32 %v795, %v805
    %v808 = vsub.f32 %v796, %v806
    %v809 = vmul.f32 %v807, %v807
    %v810 = vmul.f32 %v808, %v808
    %v811 = vsel %vm75, %v809, 0.0
    %812 = vadd.xlane.f32.xlu0 %v811
    %v813 = vpop.xlane.xlu0 %812
    %v814 = vsel %vm75, %v810, 0.0
    %815 = vadd.xlane.f32.xlu0 %v814
    %v816 = vpop.xlane.xlu0 %815
    %v817 = vmul.f32 %v813, %v82
    %v818 = vmul.f32 %v816, %v82
    %v819 = vadd.f32 %v817, 1e-12
    %v820 = vadd.f32 %v818, 1e-12
    %v821 = vrsqrt.pop %v819
    %v822 = vrsqrt.pop %v820
    %v823 = vmul.f32 %v807, %v821
    %v824 = vmul.f32 %v808, %v822
    %v826 = vlaneseq
    %v827 = vshrl.u32 %v826, 7
    %v828 = vsub.s32 0, %v827
    %v829 = vrot.slane %v797, %v828
    %v831 = vmul.f32 %v823, %v829
    %v832 = vmul.f32 %v824, %v829
    %v834 = vlaneseq
    %v835 = vshrl.u32 %v834, 7
    %v836 = vsub.s32 0, %v835
    %v837 = vrot.slane %v798, %v836
    %v839 = vadd.f32 %v831, %v837
    %v840 = vadd.f32 %v832, %v837
    %v841 = vld [vmem:[%s11] sm:$0xff]
    %v842 = vld [vmem:[%s11 + $0x8] sm:$0xff]
    %v843 = vld [vmem:[%s11 + $0x10] sm:$0xff]
    %v844 = vld [vmem:[%s11 + $0x18] sm:$0xff]
    %v845 = vld [vmem:[%s12] sm:$0x1]
    %v847 = vlaneseq
    %v848 = vshrl.u32 %v847, 7
    %v849 = vsub.s32 0, %v848
    %v850 = vrot.slane %v845, %v849
    %v853 = vsel %vm75, %v839, 0
    %v856 = vsel %vm75, %v840, 0
    %858 = vmatprep.subr.mxu0 0.0
    %859 = vmatpush1.msra.mxu0 %v841
    %860 = vmatprep.subr.mxu0 0.0
    %861 = vmatpush1.msra.mxu0 %v842
    %862 = vmatprep.subr.mxu0 0.0
    %863 = vmatpush1.msra.mxu0 %v843
    %864 = vmatprep.subr.mxu0 0.0
    %865 = vmatpush1.msra.mxu0 %v844
    %866 = vmatprep.subr.mxu0 0.0
    %867 = vmatpush1.msra.mxu0 0.0
    %868 = vmatprep.subr.mxu0 0.0
    %869 = vmatpush1.msra.mxu0 0.0
    %870 = vmatprep.subr.mxu0 0.0
    %871 = vmatpush1.msra.mxu0 0.0
    %872 = vmatprep.subr.mxu0 0.0
    %873 = vmatpush1.msra.mxu0 0.0
    %874 = vmatprep.subr.mxu0 0.0
    %875 = vmatpush1.msra.mxu0 0.0
    %876 = vmatprep.subr.mxu0 0.0
    %877 = vmatpush1.msra.mxu0 0.0
    %878 = vmatprep.subr.mxu0 0.0
    %879 = vmatpush1.msra.mxu0 0.0
    %880 = vmatprep.subr.mxu0 0.0
    %881 = vmatpush1.msra.mxu0 0.0
    %882 = vmatprep.subr.mxu0 0.0
    %883 = vmatpush1.msra.mxu0 0.0
    %884 = vmatprep.subr.mxu0 0.0
    %885 = vmatpush1.msra.mxu0 0.0
    %886 = vmatprep.subr.mxu0 0.0
    %887 = vmatpush1.msra.mxu0 0.0
    %888 = vmatprep.subr.mxu0 0.0
    %889 = vmatpush1.msra.mxu0 0.0
    %890 = vmatprep.subr.mxu0 0.0
    %891 = vmatpush1.msra.mxu0 0.0
    %892 = vmatprep.subr.mxu0 0.0
    %893 = vmatpush1.msra.mxu0 0.0
    %894 = vmatprep.subr.mxu0 0.0
    %895 = vmatpush1.msra.mxu0 0.0
    %896 = vmatprep.subr.mxu0 0.0
    %897 = vmatpush1.msra.mxu0 0.0
    %898 = vmatprep.subr.mxu0 0.0
    %899 = vmatpush1.msra.mxu0 0.0
    %900 = vmatprep.subr.mxu0 0.0
    %901 = vmatpush1.msra.mxu0 0.0
    %902 = vmatprep.subr.mxu0 0.0
    %903 = vmatpush1.msra.mxu0 0.0
    %904 = vmatprep.subr.mxu0 0.0
    %905 = vmatpush1.msra.mxu0 0.0
    %906 = vmatprep.subr.mxu0 0.0
    %907 = vmatpush1.msra.mxu0 0.0
    %908 = vmatprep.subr.mxu0 0.0
    %909 = vmatpush1.msra.mxu0 0.0
    %910 = vmatprep.subr.mxu0 0.0
    %911 = vmatpush1.msra.mxu0 0.0
    %912 = vmatprep.subr.mxu0 0.0
    %913 = vmatpush1.msra.mxu0 0.0
    %914 = vmatprep.subr.mxu0 0.0
    %915 = vmatpush1.msra.mxu0 0.0
    %916 = vmatprep.subr.mxu0 0.0
    %917 = vmatpush1.msra.mxu0 0.0
    %918 = vmatprep.subr.mxu0 0.0
    %919 = vmatpush1.msra.mxu0 0.0
    %920 = vmatprep.subr.mxu0 0.0
    %921 = vmatpush1.msra.mxu0 0.0
    %922 = vmatprep.mubr.f32.mxu0 0.0
    %923 = vmatmul.mubr.f32.gmra.mrb[0].mxu0 %v853
    %v924 = vpop.f32.mrb[0].mxu0
    %v925 = vadd.f32 %v850, %v924
    %v926 = vpop.f32.mrb[0].mxu0
    %927 = vmatprep.mubr.f32.mxu0 0.0
    %928 = vmatmul.mubr.f32.gmra.mrb[0].mxu0 %v856
    %v929 = vpop.f32.mrb[0].mxu0
    %v930 = vadd.f32 %v850, %v929
    %v931 = vpop.f32.mrb[0].mxu0
    %932 = vdwg.mxu0
    %v933 = vmul.f32 %v925, 0.5
    %v934 = vmul.f32 %v930, 0.5
    %v935 = vmul.f32 %v925, 0.044715
    %v936 = vmul.f32 %v930, 0.044715
    %v937 = vmul.f32 %v925, %v925
    %v938 = vmul.f32 %v930, %v930
    %v939 = vmul.f32 %v935, %v937
    %v940 = vmul.f32 %v936, %v938
    %v941 = vadd.f32 %v925, %v939
    %v942 = vadd.f32 %v930, %v940
    %v943 = vmul.f32 %v941, 0.7978846
    %v944 = vmul.f32 %v942, 0.7978846
    %v945 = vtanh.pop %v943
    %v946 = vtanh.pop %v944
    %v947 = vadd.f32 %v945, 1.0
    %v948 = vadd.f32 %v946, 1.0
    %v949 = vmul.f32 %v933, %v947
    %v950 = vmul.f32 %v934, %v948
    %v951 = vld [vmem:[%s13] sm:$0xff]
    %v952 = vld [vmem:[%s13 + $0x8] sm:$0xff]
    %v953 = vld [vmem:[%s13 + $0x10] sm:$0xff]
    %v954 = vld [vmem:[%s13 + $0x18] sm:$0xff]
    %v955 = vld [vmem:[%s13 + $0x20] sm:$0xff]
    %v956 = vld [vmem:[%s13 + $0x28] sm:$0xff]
    %v957 = vld [vmem:[%s13 + $0x30] sm:$0xff]
    %v958 = vld [vmem:[%s13 + $0x38] sm:$0xff]
    %v959 = vld [vmem:[%s14] sm:$0x1]
    %v961 = vlaneseq
    %v962 = vshrl.u32 %v961, 7
    %v963 = vsub.s32 0, %v962
    %v964 = vrot.slane %v959, %v963
    %vm966 = vcmask 523264
    %v968 = vsel %vm966, %v949, 0
    %v971 = vsel %vm966, %v950, 0
    %973 = vmatprep.subr.mxu0 0.0
    %974 = vmatpush1.msra.mxu0 %v951
    %975 = vmatprep.subr.mxu0 0.0
    %976 = vmatpush1.msra.mxu0 %v952
    %977 = vmatprep.subr.mxu0 0.0
    %978 = vmatpush1.msra.mxu0 %v953
    %979 = vmatprep.subr.mxu0 0.0
    %980 = vmatpush1.msra.mxu0 %v954
    %981 = vmatprep.subr.mxu0 0.0
    %982 = vmatpush1.msra.mxu0 %v955
    %983 = vmatprep.subr.mxu0 0.0
    %984 = vmatpush1.msra.mxu0 %v956
    %985 = vmatprep.subr.mxu0 0.0
    %986 = vmatpush1.msra.mxu0 %v957
    %987 = vmatprep.subr.mxu0 0.0
    %988 = vmatpush1.msra.mxu0 %v958
    %989 = vmatprep.subr.mxu0 0.0
    %990 = vmatpush1.msra.mxu0 0.0
    %991 = vmatprep.subr.mxu0 0.0
    %992 = vmatpush1.msra.mxu0 0.0
    %993 = vmatprep.subr.mxu0 0.0
    %994 = vmatpush1.msra.mxu0 0.0
    %995 = vmatprep.subr.mxu0 0.0
    %996 = vmatpush1.msra.mxu0 0.0
    %997 = vmatprep.subr.mxu0 0.0
    %998 = vmatpush1.msra.mxu0 0.0
    %999 = vmatprep.subr.mxu0 0.0
    %1000 = vmatpush1.msra.mxu0 0.0
    %1001 = vmatprep.subr.mxu0 0.0
    %1002 = vmatpush1.msra.mxu0 0.0
    %1003 = vmatprep.subr.mxu0 0.0
    %1004 = vmatpush1.msra.mxu0 0.0
    %1005 = vmatprep.subr.mxu0 0.0
    %1006 = vmatpush1.msra.mxu0 0.0
    %1007 = vmatprep.subr.mxu0 0.0
    %1008 = vmatpush1.msra.mxu0 0.0
    %1009 = vmatprep.subr.mxu0 0.0
    %1010 = vmatpush1.msra.mxu0 0.0
    %1011 = vmatprep.subr.mxu0 0.0
    %1012 = vmatpush1.msra.mxu0 0.0
    %1013 = vmatprep.subr.mxu0 0.0
    %1014 = vmatpush1.msra.mxu0 0.0
    %1015 = vmatprep.subr.mxu0 0.0
    %1016 = vmatpush1.msra.mxu0 0.0
    %1017 = vmatprep.subr.mxu0 0.0
    %1018 = vmatpush1.msra.mxu0 0.0
    %1019 = vmatprep.subr.mxu0 0.0
    %1020 = vmatpush1.msra.mxu0 0.0
    %1021 = vmatprep.subr.mxu0 0.0
    %1022 = vmatpush1.msra.mxu0 0.0
    %1023 = vmatprep.subr.mxu0 0.0
    %1024 = vmatpush1.msra.mxu0 0.0
    %1025 = vmatprep.subr.mxu0 0.0
    %1026 = vmatpush1.msra.mxu0 0.0
    %1027 = vmatprep.subr.mxu0 0.0
    %1028 = vmatpush1.msra.mxu0 0.0
    %1029 = vmatprep.subr.mxu0 0.0
    %1030 = vmatpush1.msra.mxu0 0.0
    %1031 = vmatprep.subr.mxu0 0.0
    %1032 = vmatpush1.msra.mxu0 0.0
    %1033 = vmatprep.subr.mxu0 0.0
    %1034 = vmatpush1.msra.mxu0 0.0
    %1035 = vmatprep.subr.mxu0 0.0
    %1036 = vmatpush1.msra.mxu0 0.0
    %1037 = vmatprep.mubr.f32.mxu0 0.0
    %1038 = vmatmul.mubr.f32.gmra.mrb[0].mxu0 %v968
    %v1039 = vpop.f32.mrb[0].mxu0
    %v1040 = vadd.f32 %v964, %v1039
    %v1041 = vpop.f32.mrb[0].mxu0
    %1042 = vmatprep.mubr.f32.mxu0 0.0
    %1043 = vmatmul.mubr.f32.gmra.mrb[0].mxu0 %v971
    %v1044 = vpop.f32.mrb[0].mxu0
    %v1045 = vadd.f32 %v964, %v1044
    %v1046 = vpop.f32.mrb[0].mxu0
    %1047 = vdwg.mxu0
    %v1048 = vadd.f32 %v839, %v1040
    %v1049 = vadd.f32 %v840, %v1045
    %v1050 = vld [vmem:[%s15] sm:$0x1]
    %v1051 = vld [vmem:[%s16] sm:$0x1]
    %v1052 = vsel %vm75, %v1048, 0.0
    %1053 = vadd.xlane.f32.xlu0 %v1052
    %v1054 = vpop.xlane.xlu0 %1053
    %v1055 = vsel %vm75, %v1049, 0.0
    %1056 = vadd.xlane.f32.xlu0 %v1055
    %v1057 = vpop.xlane.xlu0 %1056
    %v1058 = vmul.f32 %v1054, %v82
    %v1059 = vmul.f32 %v1057, %v82
    %v1060 = vsub.f32 %v1048, %v1058
    %v1061 = vsub.f32 %v1049, %v1059
    %v1062 = vmul.f32 %v1060, %v1060
    %v1063 = vmul.f32 %v1061, %v1061
    %v1064 = vsel %vm75, %v1062, 0.0
    %1065 = vadd.xlane.f32.xlu0 %v1064
    %v1066 = vpop.xlane.xlu0 %1065
    %v1067 = vsel %vm75, %v1063, 0.0
    %1068 = vadd.xlane.f32.xlu0 %v1067
    %v1069 = vpop.xlane.xlu0 %1068
    %v1070 = vmul.f32 %v1066, %v82
    %v1071 = vmul.f32 %v1069, %v82
    %v1072 = vadd.f32 %v1070, 1e-12
    %v1073 = vadd.f32 %v1071, 1e-12
    %v1074 = vrsqrt.pop %v1072
    %v1075 = vrsqrt.pop %v1073
    %v1076 = vmul.f32 %v1060, %v1074
    %v1077 = vmul.f32 %v1061, %v1075
    %v1079 = vlaneseq
    %v1080 = vshrl.u32 %v1079, 7
    %v1081 = vsub.s32 0, %v1080
    %v1082 = vrot.slane %v1050, %v1081
    %v1084 = vmul.f32 %v1076, %v1082
    %v1085 = vmul.f32 %v1077, %v1082
    %v1087 = vlaneseq
    %v1088 = vshrl.u32 %v1087, 7
    %v1089 = vsub.s32 0, %v1088
    %v1090 = vrot.slane %v1051, %v1089
    %v1092 = vadd.f32 %v1084, %v1090
    %v1093 = vadd.f32 %v1085, %v1090
    %s1094 = scalar_lea.vmem %s5, 32
    %v1095 = vld [vmem:[%s1094] sm:$0xff]
    %v1096 = vld [vmem:[%s1094 + $0x8] sm:$0xff]
    %v1097 = vld [vmem:[%s1094 + $0x10] sm:$0xff]
    %v1098 = vld [vmem:[%s1094 + $0x18] sm:$0xff]
    %s1099 = scalar_lea.vmem %s6, 1
    %v1100 = vld [vmem:[%s1099] sm:$0x1]
    %v1102 = vlaneseq
    %v1103 = vshrl.u32 %v1102, 7
    %v1104 = vsub.s32 0, %v1103
    %v1105 = vrot.slane %v1100, %v1104
    %v1108 = vsel %vm75, %v1092, 0
    %v1111 = vsel %vm75, %v1093, 0
    %1113 = vmatprep.subr.mxu0 0.0
    %1114 = vmatpush1.msra.mxu0 %v1095
    %1115 = vmatprep.subr.mxu0 0.0
    %1116 = vmatpush1.msra.mxu0 %v1096
    %1117 = vmatprep.subr.mxu0 0.0
    %1118 = vmatpush1.msra.mxu0 %v1097
    %1119 = vmatprep.subr.mxu0 0.0
    %1120 = vmatpush1.msra.mxu0 %v1098
    %1121 = vmatprep.subr.mxu0 0.0
    %1122 = vmatpush1.msra.mxu0 0.0
    %1123 = vmatprep.subr.mxu0 0.0
    %1124 = vmatpush1.msra.mxu0 0.0
    %1125 = vmatprep.subr.mxu0 0.0
    %1126 = vmatpush1.msra.mxu0 0.0
    %1127 = vmatprep.subr.mxu0 0.0
    %1128 = vmatpush1.msra.mxu0 0.0
    %1129 = vmatprep.subr.mxu0 0.0
    %1130 = vmatpush1.msra.mxu0 0.0
    %1131 = vmatprep.subr.mxu0 0.0
    %1132 = vmatpush1.msra.mxu0 0.0
    %1133 = vmatprep.subr.mxu0 0.0
    %1134 = vmatpush1.msra.mxu0 0.0
    %1135 = vmatprep.subr.mxu0 0.0
    %1136 = vmatpush1.msra.mxu0 0.0
    %1137 = vmatprep.subr.mxu0 0.0
    %1138 = vmatpush1.msra.mxu0 0.0
    %1139 = vmatprep.subr.mxu0 0.0
    %1140 = vmatpush1.msra.mxu0 0.0
    %1141 = vmatprep.subr.mxu0 0.0
    %1142 = vmatpush1.msra.mxu0 0.0
    %1143 = vmatprep.subr.mxu0 0.0
    %1144 = vmatpush1.msra.mxu0 0.0
    %1145 = vmatprep.subr.mxu0 0.0
    %1146 = vmatpush1.msra.mxu0 0.0
    %1147 = vmatprep.subr.mxu0 0.0
    %1148 = vmatpush1.msra.mxu0 0.0
    %1149 = vmatprep.subr.mxu0 0.0
    %1150 = vmatpush1.msra.mxu0 0.0
    %1151 = vmatprep.subr.mxu0 0.0
    %1152 = vmatpush1.msra.mxu0 0.0
    %1153 = vmatprep.subr.mxu0 0.0
    %1154 = vmatpush1.msra.mxu0 0.0
    %1155 = vmatprep.subr.mxu0 0.0
    %1156 = vmatpush1.msra.mxu0 0.0
    %1157 = vmatprep.subr.mxu0 0.0
    %1158 = vmatpush1.msra.mxu0 0.0
    %1159 = vmatprep.subr.mxu0 0.0
    %1160 = vmatpush1.msra.mxu0 0.0
    %1161 = vmatprep.subr.mxu0 0.0
    %1162 = vmatpush1.msra.mxu0 0.0
    %1163 = vmatprep.subr.mxu0 0.0
    %1164 = vmatpush1.msra.mxu0 0.0
    %1165 = vmatprep.subr.mxu0 0.0
    %1166 = vmatpush1.msra.mxu0 0.0
    %1167 = vmatprep.subr.mxu0 0.0
    %1168 = vmatpush1.msra.mxu0 0.0
    %1169 = vmatprep.subr.mxu0 0.0
    %1170 = vmatpush1.msra.mxu0 0.0
    %1171 = vmatprep.subr.mxu0 0.0
    %1172 = vmatpush1.msra.mxu0 0.0
    %1173 = vmatprep.subr.mxu0 0.0
    %1174 = vmatpush1.msra.mxu0 0.0
    %1175 = vmatprep.subr.mxu0 0.0
    %1176 = vmatpush1.msra.mxu0 0.0
    %1177 = vmatprep.mubr.f32.mxu0 0.0
    %1178 = vmatmul.mubr.f32.gmra.mrb[0].mxu0 %v1108
    %v1179 = vpop.f32.mrb[0].mxu0
    %v1180 = vadd.f32 %v1105, %v1179
    %v1181 = vpop.f32.mrb[0].mxu0
    %1182 = vmatprep.mubr.f32.mxu0 0.0
    %1183 = vmatmul.mubr.f32.gmra.mrb[0].mxu0 %v1111
    %v1184 = vpop.f32.mrb[0].mxu0
    %v1185 = vadd.f32 %v1105, %v1184
    %v1186 = vpop.f32.mrb[0].mxu0
    %1187 = vdwg.mxu0
    %s1188 = scalar_lea.vmem %s7, 32
    %v1189 = vld [vmem:[%s1188] sm:$0xff]
    %v1190 = vld [vmem:[%s1188 + $0x8] sm:$0xff]
    %v1191 = vld [vmem:[%s1188 + $0x10] sm:$0xff]
    %v1192 = vld [vmem:[%s1188 + $0x18] sm:$0xff]
    %1195 = vrot.lane.b32.xlu0 %v1180, 96
    %v1196 = vpop.permute.xlu0 %1195
    %1197 = vrot.lane.b32.xlu0 %v1185, 96
    %v1198 = vpop.permute.xlu0 %1197
    %v1199 = vsel %vm223, %v1180, 0
    %v1201 = vsel %vm223, %v1185, 0
    %v1203 = vsel %vm223, %v1196, 0
    %v1205 = vsel %vm223, %v1198, 0
    %1207 = vmatprep.subr.mxu0 0.0
    %1208 = vmatpush1.xpose.msra.mxu0 %v1203
    %1209 = vmatprep.subr.mxu0 0.0
    %1210 = vmatpush1.xpose.msra.mxu0 %v1205
    %1211 = vmatprep.subr.mxu0 0.0
    %1212 = vmatpush1.xpose.msra.mxu0 0.0
    %1213 = vmatprep.subr.mxu0 0.0
    %1214 = vmatpush1.xpose.msra.mxu0 0.0
    %1215 = vmatprep.subr.mxu0 0.0
    %1216 = vmatpush1.xpose.msra.mxu0 0.0
    %1217 = vmatprep.subr.mxu0 0.0
    %1218 = vmatpush1.xpose.msra.mxu0 0.0
    %1219 = vmatprep.subr.mxu0 0.0
    %1220 = vmatpush1.xpose.msra.mxu0 0.0
    %1221 = vmatprep.subr.mxu0 0.0
    %1222 = vmatpush1.xpose.msra.mxu0 0.0
    %1223 = vmatprep.subr.mxu0 0.0
    %1224 = vmatpush1.xpose.msra.mxu0 0.0
    %1225 = vmatprep.subr.mxu0 0.0
    %1226 = vmatpush1.xpose.msra.mxu0 0.0
    %1227 = vmatprep.subr.mxu0 0.0
    %1228 = vmatpush1.xpose.msra.mxu0 0.0
    %1229 = vmatprep.subr.mxu0 0.0
    %1230 = vmatpush1.xpose.msra.mxu0 0.0
    %1231 = vmatprep.subr.mxu0 0.0
    %1232 = vmatpush1.xpose.msra.mxu0 0.0
    %1233 = vmatprep.subr.mxu0 0.0
    %1234 = vmatpush1.xpose.msra.mxu0 0.0
    %1235 = vmatprep.subr.mxu0 0.0
    %1236 = vmatpush1.xpose.msra.mxu0 0.0
    %1237 = vmatprep.subr.mxu0 0.0
    %1238 = vmatpush1.xpose.msra.mxu0 0.0
    %1239 = vmatprep.subr.mxu0 0.0
    %1240 = vmatpush1.xpose.msra.mxu0 0.0
    %1241 = vmatprep.subr.mxu0 0.0
    %1242 = vmatpush1.xpose.msra.mxu0 0.0
    %1243 = vmatprep.subr.mxu0 0.0
    %1244 = vmatpush1.xpose.msra.mxu0 0.0
    %1245 = vmatprep.subr.mxu0 0.0
    %1246 = vmatpush1.xpose.msra.mxu0 0.0
    %1247 = vmatprep.subr.mxu0 0.0
    %1248 = vmatpush1.xpose.msra.mxu0 0.0
    %1249 = vmatprep.subr.mxu0 0.0
    %1250 = vmatpush1.xpose.msra.mxu0 0.0
    %1251 = vmatprep.subr.mxu0 0.0
    %1252 = vmatpush1.xpose.msra.mxu0 0.0
    %1253 = vmatprep.subr.mxu0 0.0
    %1254 = vmatpush1.xpose.msra.mxu0 0.0
    %1255 = vmatprep.subr.mxu0 0.0
    %1256 = vmatpush1.xpose.msra.mxu0 0.0
    %1257 = vmatprep.subr.mxu0 0.0
    %1258 = vmatpush1.xpose.msra.mxu0 0.0
    %1259 = vmatprep.subr.mxu0 0.0
    %1260 = vmatpush1.xpose.msra.mxu0 0.0
    %1261 = vmatprep.subr.mxu0 0.0
    %1262 = vmatpush1.xpose.msra.mxu0 0.0
    %1263 = vmatprep.subr.mxu0 0.0
    %1264 = vmatpush1.xpose.msra.mxu0 0.0
    %1265 = vmatprep.subr.mxu0 0.0
    %1266 = vmatpush1.xpose.msra.mxu0 0.0
    %1267 = vmatprep.subr.mxu0 0.0
    %1268 = vmatpush1.xpose.msra.mxu0 0.0
    %1269 = vmatprep.subr.mxu0 0.0
    %1270 = vmatpush1.xpose.msra.mxu0 0.0
    %1271 = vmatprep.mubr.f32.mxu0 0.0
    %1272 = vmatmul.mubr.f32.gmra.mrb[0].mxu0 %v1199
    %v1273 = vpop.f32.mrb[0].mxu0
    %v1274 = vadd.f32 0.0, %v1273
    %v1275 = vpop.f32.mrb[0].mxu0
    %1276 = vmatprep.mubr.f32.mxu0 0.0
    %1277 = vmatmul.mubr.f32.gmra.mrb[0].mxu0 %v1201
    %v1278 = vpop.f32.mrb[0].mxu0
    %v1279 = vadd.f32 0.0, %v1278
    %v1280 = vpop.f32.mrb[0].mxu0
    %1281 = vdwg.mxu0
    %v1282 = vmul.f32 %v1274, 0.25
    %v1283 = vmul.f32 %v1279, 0.25
    %v1284 = vadd.f32 %v1282, %v119
    %v1285 = vadd.f32 %v1283, %v120
    %v1286 = vsel %vm223, %v1284, -inf
    %1287 = vmax.xlane.f32.xlu0 %v1286
    %v1288 = vpop.xlane.xlu0 %1287
    %v1289 = vsel %vm223, %v1285, -inf
    %1290 = vmax.xlane.f32.xlu0 %v1289
    %v1291 = vpop.xlane.xlu0 %1290
    %v1292 = vsub.f32 %v1284, %v1288
    %v1293 = vsub.f32 %v1285, %v1291
    %v1294 = vmul.f32 %v1292, 1.442695
    %v1295 = vpow.pop %v1294
    %v1296 = vmul.f32 %v1293, 1.442695
    %v1297 = vpow.pop %v1296
    %v1298 = vsel %vm223, %v1295, 0.0
    %1299 = vadd.xlane.f32.xlu0 %v1298
    %v1300 = vpop.xlane.xlu0 %1299
    %v1301 = vsel %vm223, %v1297, 0.0
    %1302 = vadd.xlane.f32.xlu0 %v1301
    %v1303 = vpop.xlane.xlu0 %1302
    %v1304 = vrcp.pop %v1300
    %v1305 = vmul.f32 %v1295, %v1304
    %v1306 = vrcp.pop %v1303
    %v1307 = vmul.f32 %v1297, %v1306
    %1308 = vrot.lane.b32.xlu0 %v1180, 64
    %v1309 = vpop.permute.xlu0 %1308
    %1310 = vrot.lane.b32.xlu0 %v1185, 64
    %v1311 = vpop.permute.xlu0 %1310
    %v1315 = vsel %vm223, %v1305, 0
    %v1318 = vsel %vm223, %v1307, 0
    %1320 = vmatprep.subr.mxu0 0.0
    %1321 = vmatpush1.msra.mxu0 %v1309
    %1322 = vmatprep.subr.mxu0 0.0
    %1323 = vmatpush1.msra.mxu0 %v1311
    %1324 = vmatprep.subr.mxu0 0.0
    %1325 = vmatpush1.msra.mxu0 0.0
    %1326 = vmatprep.subr.mxu0 0.0
    %1327 = vmatpush1.msra.mxu0 0.0
    %1328 = vmatprep.subr.mxu0 0.0
    %1329 = vmatpush1.msra.mxu0 0.0
    %1330 = vmatprep.subr.mxu0 0.0
    %1331 = vmatpush1.msra.mxu0 0.0
    %1332 = vmatprep.subr.mxu0 0.0
    %1333 = vmatpush1.msra.mxu0 0.0
    %1334 = vmatprep.subr.mxu0 0.0
    %1335 = vmatpush1.msra.mxu0 0.0
    %1336 = vmatprep.subr.mxu0 0.0
    %1337 = vmatpush1.msra.mxu0 0.0
    %1338 = vmatprep.subr.mxu0 0.0
    %1339 = vmatpush1.msra.mxu0 0.0
    %1340 = vmatprep.subr.mxu0 0.0
    %1341 = vmatpush1.msra.mxu0 0.0
    %1342 = vmatprep.subr.mxu0 0.0
    %1343 = vmatpush1.msra.mxu0 0.0
    %1344 = vmatprep.subr.mxu0 0.0
    %1345 = vmatpush1.msra.mxu0 0.0
    %1346 = vmatprep.subr.mxu0 0.0
    %1347 = vmatpush1.msra.mxu0 0.0
    %1348 = vmatprep.subr.mxu0 0.0
    %1349 = vmatpush1.msra.mxu0 0.0
    %1350 = vmatprep.subr.mxu0 0.0
    %1351 = vmatpush1.msra.mxu0 0.0
    %1352 = vmatprep.subr.mxu0 0.0
    %1353 = vmatpush1.msra.mxu0 0.0
    %1354 = vmatprep.subr.mxu0 0.0
    %1355 = vmatpush1.msra.mxu0 0.0
    %1356 = vmatprep.subr.mxu0 0.0
    %1357 = vmatpush1.msra.mxu0 0.0
    %1358 = vmatprep.subr.mxu0 0.0
    %1359 = vmatpush1.msra.mxu0 0.0
    %1360 = vmatprep.subr.mxu0 0.0
    %1361 = vmatpush1.msra.mxu0 0.0
    %1362 = vmatprep.subr.mxu0 0.0
    %1363 = vmatpush1.msra.mxu0 0.0
    %1364 = vmatprep.subr.mxu0 0.0
    %1365 = vmatpush1.msra.mxu0 0.0
    %1366 = vmatprep.subr.mxu0 0.0
    %1367 = vmatpush1.msra.mxu0 0.0
    %1368 = vmatprep.subr.mxu0 0.0
    %1369 = vmatpush1.msra.mxu0 0.0
    %1370 = vmatprep.subr.mxu0 0.0
    %1371 = vmatpush1.msra.mxu0 0.0
    %1372 = vmatprep.subr.mxu0 0.0
    %1373 = vmatpush1.msra.mxu0 0.0
    %1374 = vmatprep.subr.mxu0 0.0
    %1375 = vmatpush1.msra.mxu0 0.0
    %1376 = vmatprep.subr.mxu0 0.0
    %1377 = vmatpush1.msra.mxu0 0.0
    %1378 = vmatprep.subr.mxu0 0.0
    %1379 = vmatpush1.msra.mxu0 0.0
    %1380 = vmatprep.subr.mxu0 0.0
    %1381 = vmatpush1.msra.mxu0 0.0
    %1382 = vmatprep.subr.mxu0 0.0
    %1383 = vmatpush1.msra.mxu0 0.0
    %1384 = vmatprep.mubr.f32.mxu0 0.0
    %1385 = vmatmul.mubr.f32.gmra.mrb[0].mxu0 %v1315
    %v1386 = vpop.f32.mrb[0].mxu0
    %v1387 = vadd.f32 0.0, %v1386
    %v1388 = vpop.f32.mrb[0].mxu0
    %1389 = vmatprep.mubr.f32.mxu0 0.0
    %1390 = vmatmul.mubr.f32.gmra.mrb[0].mxu0 %v1318
    %v1391 = vpop.f32.mrb[0].mxu0
    %v1392 = vadd.f32 0.0, %v1391
    %v1393 = vpop.f32.mrb[0].mxu0
    %1394 = vdwg.mxu0
    %1395 = vrot.lane.b32.xlu0 %v1180, 112
    %v1396 = vpop.permute.xlu0 %1395
    %1397 = vrot.lane.b32.xlu0 %v1185, 112
    %v1398 = vpop.permute.xlu0 %1397
    %1399 = vrot.lane.b32.xlu0 %v1180, 80
    %v1400 = vpop.permute.xlu0 %1399
    %1401 = vrot.lane.b32.xlu0 %v1185, 80
    %v1402 = vpop.permute.xlu0 %1401
    %v1403 = vsel %vm223, %v1396, 0
    %v1405 = vsel %vm223, %v1398, 0
    %v1407 = vsel %vm223, %v1400, 0
    %v1409 = vsel %vm223, %v1402, 0
    %1411 = vmatprep.subr.mxu0 0.0
    %1412 = vmatpush1.xpose.msra.mxu0 %v1407
    %1413 = vmatprep.subr.mxu0 0.0
    %1414 = vmatpush1.xpose.msra.mxu0 %v1409
    %1415 = vmatprep.subr.mxu0 0.0
    %1416 = vmatpush1.xpose.msra.mxu0 0.0
    %1417 = vmatprep.subr.mxu0 0.0
    %1418 = vmatpush1.xpose.msra.mxu0 0.0
    %1419 = vmatprep.subr.mxu0 0.0
    %1420 = vmatpush1.xpose.msra.mxu0 0.0
    %1421 = vmatprep.subr.mxu0 0.0
    %1422 = vmatpush1.xpose.msra.mxu0 0.0
    %1423 = vmatprep.subr.mxu0 0.0
    %1424 = vmatpush1.xpose.msra.mxu0 0.0
    %1425 = vmatprep.subr.mxu0 0.0
    %1426 = vmatpush1.xpose.msra.mxu0 0.0
    %1427 = vmatprep.subr.mxu0 0.0
    %1428 = vmatpush1.xpose.msra.mxu0 0.0
    %1429 = vmatprep.subr.mxu0 0.0
    %1430 = vmatpush1.xpose.msra.mxu0 0.0
    %1431 = vmatprep.subr.mxu0 0.0
    %1432 = vmatpush1.xpose.msra.mxu0 0.0
    %1433 = vmatprep.subr.mxu0 0.0
    %1434 = vmatpush1.xpose.msra.mxu0 0.0
    %1435 = vmatprep.subr.mxu0 0.0
    %1436 = vmatpush1.xpose.msra.mxu0 0.0
    %1437 = vmatprep.subr.mxu0 0.0
    %1438 = vmatpush1.xpose.msra.mxu0 0.0
    %1439 = vmatprep.subr.mxu0 0.0
    %1440 = vmatpush1.xpose.msra.mxu0 0.0
    %1441 = vmatprep.subr.mxu0 0.0
    %1442 = vmatpush1.xpose.msra.mxu0 0.0
    %1443 = vmatprep.subr.mxu0 0.0
    %1444 = vmatpush1.xpose.msra.mxu0 0.0
    %1445 = vmatprep.subr.mxu0 0.0
    %1446 = vmatpush1.xpose.msra.mxu0 0.0
    %1447 = vmatprep.subr.mxu0 0.0
    %1448 = vmatpush1.xpose.msra.mxu0 0.0
    %1449 = vmatprep.subr.mxu0 0.0
    %1450 = vmatpush1.xpose.msra.mxu0 0.0
    %1451 = vmatprep.subr.mxu0 0.0
    %1452 = vmatpush1.xpose.msra.mxu0 0.0
    %1453 = vmatprep.subr.mxu0 0.0
    %1454 = vmatpush1.xpose.msra.mxu0 0.0
    %1455 = vmatprep.subr.mxu0 0.0
    %1456 = vmatpush1.xpose.msra.mxu0 0.0
    %1457 = vmatprep.subr.mxu0 0.0
    %1458 = vmatpush1.xpose.msra.mxu0 0.0
    %1459 = vmatprep.subr.mxu0 0.0
    %1460 = vmatpush1.xpose.msra.mxu0 0.0
    %1461 = vmatprep.subr.mxu0 0.0
    %1462 = vmatpush1.xpose.msra.mxu0 0.0
    %1463 = vmatprep.subr.mxu0 0.0
    %1464 = vmatpush1.xpose.msra.mxu0 0.0
    %1465 = vmatprep.subr.mxu0 0.0
    %1466 = vmatpush1.xpose.msra.mxu0 0.0
    %1467 = vmatprep.subr.mxu0 0.0
    %1468 = vmatpush1.xpose.msra.mxu0 0.0
    %1469 = vmatprep.subr.mxu0 0.0
    %1470 = vmatpush1.xpose.msra.mxu0 0.0
    %1471 = vmatprep.subr.mxu0 0.0
    %1472 = vmatpush1.xpose.msra.mxu0 0.0
    %1473 = vmatprep.subr.mxu0 0.0
    %1474 = vmatpush1.xpose.msra.mxu0 0.0
    %1475 = vmatprep.mubr.f32.mxu0 0.0
    %1476 = vmatmul.mubr.f32.gmra.mrb[0].mxu0 %v1403
    %v1477 = vpop.f32.mrb[0].mxu0
    %v1478 = vadd.f32 0.0, %v1477
    %v1479 = vpop.f32.mrb[0].mxu0
    %1480 = vmatprep.mubr.f32.mxu0 0.0
    %1481 = vmatmul.mubr.f32.gmra.mrb[0].mxu0 %v1405
    %v1482 = vpop.f32.mrb[0].mxu0
    %v1483 = vadd.f32 0.0, %v1482
    %v1484 = vpop.f32.mrb[0].mxu0
    %1485 = vdwg.mxu0
    %v1486 = vmul.f32 %v1478, 0.25
    %v1487 = vmul.f32 %v1483, 0.25
    %v1488 = vadd.f32 %v1486, %v119
    %v1489 = vadd.f32 %v1487, %v120
    %v1490 = vsel %vm223, %v1488, -inf
    %1491 = vmax.xlane.f32.xlu0 %v1490
    %v1492 = vpop.xlane.xlu0 %1491
    %v1493 = vsel %vm223, %v1489, -inf
    %1494 = vmax.xlane.f32.xlu0 %v1493
    %v1495 = vpop.xlane.xlu0 %1494
    %v1496 = vsub.f32 %v1488, %v1492
    %v1497 = vsub.f32 %v1489, %v1495
    %v1498 = vmul.f32 %v1496, 1.442695
    %v1499 = vpow.pop %v1498
    %v1500 = vmul.f32 %v1497, 1.442695
    %v1501 = vpow.pop %v1500
    %v1502 = vsel %vm223, %v1499, 0.0
    %1503 = vadd.xlane.f32.xlu0 %v1502
    %v1504 = vpop.xlane.xlu0 %1503
    %v1505 = vsel %vm223, %v1501, 0.0
    %1506 = vadd.xlane.f32.xlu0 %v1505
    %v1507 = vpop.xlane.xlu0 %1506
    %v1508 = vrcp.pop %v1504
    %v1509 = vmul.f32 %v1499, %v1508
    %v1510 = vrcp.pop %v1507
    %v1511 = vmul.f32 %v1501, %v1510
    %1512 = vrot.lane.b32.xlu0 %v1180, 48
    %v1513 = vpop.permute.xlu0 %1512
    %1514 = vrot.lane.b32.xlu0 %v1185, 48
    %v1515 = vpop.permute.xlu0 %1514
    %v1519 = vsel %vm223, %v1509, 0
    %v1522 = vsel %vm223, %v1511, 0
    %1524 = vmatprep.subr.mxu0 0.0
    %1525 = vmatpush1.msra.mxu0 %v1513
    %1526 = vmatprep.subr.mxu0 0.0
    %1527 = vmatpush1.msra.mxu0 %v1515
    %1528 = vmatprep.subr.mxu0 0.0
    %1529 = vmatpush1.msra.mxu0 0.0
    %1530 = vmatprep.subr.mxu0 0.0
    %1531 = vmatpush1.msra.mxu0 0.0
    %1532 = vmatprep.subr.mxu0 0.0
    %1533 = vmatpush1.msra.mxu0 0.0
    %1534 = vmatprep.subr.mxu0 0.0
    %1535 = vmatpush1.msra.mxu0 0.0
    %1536 = vmatprep.subr.mxu0 0.0
    %1537 = vmatpush1.msra.mxu0 0.0
    %1538 = vmatprep.subr.mxu0 0.0
    %1539 = vmatpush1.msra.mxu0 0.0
    %1540 = vmatprep.subr.mxu0 0.0
    %1541 = vmatpush1.msra.mxu0 0.0
    %1542 = vmatprep.subr.mxu0 0.0
    %1543 = vmatpush1.msra.mxu0 0.0
    %1544 = vmatprep.subr.mxu0 0.0
    %1545 = vmatpush1.msra.mxu0 0.0
    %1546 = vmatprep.subr.mxu0 0.0
    %1547 = vmatpush1.msra.mxu0 0.0
    %1548 = vmatprep.subr.mxu0 0.0
    %1549 = vmatpush1.msra.mxu0 0.0
    %1550 = vmatprep.subr.mxu0 0.0
    %1551 = vmatpush1.msra.mxu0 0.0
    %1552 = vmatprep.subr.mxu0 0.0
    %1553 = vmatpush1.msra.mxu0 0.0
    %1554 = vmatprep.subr.mxu0 0.0
    %1555 = vmatpush1.msra.mxu0 0.0
    %1556 = vmatprep.subr.mxu0 0.0
    %1557 = vmatpush1.msra.mxu0 0.0
    %1558 = vmatprep.subr.mxu0 0.0
    %1559 = vmatpush1.msra.mxu0 0.0
    %1560 = vmatprep.subr.mxu0 0.0
    %1561 = vmatpush1.msra.mxu0 0.0
    %1562 = vmatprep.subr.mxu0 0.0
    %1563 = vmatpush1.msra.mxu0 0.0
    %1564 = vmatprep.subr.mxu0 0.0
    %1565 = vmatpush1.msra.mxu0 0.0
    %1566 = vmatprep.subr.mxu0 0.0
    %1567 = vmatpush1.msra.mxu0 0.0
    %1568 = vmatprep.subr.mxu0 0.0
    %1569 = vmatpush1.msra.mxu0 0.0
    %1570 = vmatprep.subr.mxu0 0.0
    %1571 = vmatpush1.msra.mxu0 0.0
    %1572 = vmatprep.subr.mxu0 0.0
    %1573 = vmatpush1.msra.mxu0 0.0
    %1574 = vmatprep.subr.mxu0 0.0
    %1575 = vmatpush1.msra.mxu0 0.0
    %1576 = vmatprep.subr.mxu0 0.0
    %1577 = vmatpush1.msra.mxu0 0.0
    %1578 = vmatprep.subr.mxu0 0.0
    %1579 = vmatpush1.msra.mxu0 0.0
    %1580 = vmatprep.subr.mxu0 0.0
    %1581 = vmatpush1.msra.mxu0 0.0
    %1582 = vmatprep.subr.mxu0 0.0
    %1583 = vmatpush1.msra.mxu0 0.0
    %1584 = vmatprep.subr.mxu0 0.0
    %1585 = vmatpush1.msra.mxu0 0.0
    %1586 = vmatprep.subr.mxu0 0.0
    %1587 = vmatpush1.msra.mxu0 0.0
    %1588 = vmatprep.mubr.f32.mxu0 0.0
    %1589 = vmatmul.mubr.f32.gmra.mrb[0].mxu0 %v1519
    %v1590 = vpop.f32.mrb[0].mxu0
    %v1591 = vadd.f32 0.0, %v1590
    %v1592 = vpop.f32.mrb[0].mxu0
    %1593 = vmatprep.mubr.f32.mxu0 0.0
    %1594 = vmatmul.mubr.f32.gmra.mrb[0].mxu0 %v1522
    %v1595 = vpop.f32.mrb[0].mxu0
    %v1596 = vadd.f32 0.0, %v1595
    %v1597 = vpop.f32.mrb[0].mxu0
    %1598 = vdwg.mxu0
    %v1600 = vsel %vm223, %v1591, 0
    %v1603 = vsel %vm223, %v1596, 0
    %1605 = vmatprep.subr.mxu0 0.0
    %1606 = vmatpush1.msra.mxu0 %v1191
    %1607 = vmatprep.subr.mxu0 0.0
    %1608 = vmatpush1.msra.mxu0 %v1192
    %1609 = vmatprep.subr.mxu0 0.0
    %1610 = vmatpush1.msra.mxu0 0.0
    %1611 = vmatprep.subr.mxu0 0.0
    %1612 = vmatpush1.msra.mxu0 0.0
    %1613 = vmatprep.subr.mxu0 0.0
    %1614 = vmatpush1.msra.mxu0 0.0
    %1615 = vmatprep.subr.mxu0 0.0
    %1616 = vmatpush1.msra.mxu0 0.0
    %1617 = vmatprep.subr.mxu0 0.0
    %1618 = vmatpush1.msra.mxu0 0.0
    %1619 = vmatprep.subr.mxu0 0.0
    %1620 = vmatpush1.msra.mxu0 0.0
    %1621 = vmatprep.subr.mxu0 0.0
    %1622 = vmatpush1.msra.mxu0 0.0
    %1623 = vmatprep.subr.mxu0 0.0
    %1624 = vmatpush1.msra.mxu0 0.0
    %1625 = vmatprep.subr.mxu0 0.0
    %1626 = vmatpush1.msra.mxu0 0.0
    %1627 = vmatprep.subr.mxu0 0.0
    %1628 = vmatpush1.msra.mxu0 0.0
    %1629 = vmatprep.subr.mxu0 0.0
    %1630 = vmatpush1.msra.mxu0 0.0
    %1631 = vmatprep.subr.mxu0 0.0
    %1632 = vmatpush1.msra.mxu0 0.0
    %1633 = vmatprep.subr.mxu0 0.0
    %1634 = vmatpush1.msra.mxu0 0.0
    %1635 = vmatprep.subr.mxu0 0.0
    %1636 = vmatpush1.msra.mxu0 0.0
    %1637 = vmatprep.subr.mxu0 0.0
    %1638 = vmatpush1.msra.mxu0 0.0
    %1639 = vmatprep.subr.mxu0 0.0
    %1640 = vmatpush1.msra.mxu0 0.0
    %1641 = vmatprep.subr.mxu0 0.0
    %1642 = vmatpush1.msra.mxu0 0.0
    %1643 = vmatprep.subr.mxu0 0.0
    %1644 = vmatpush1.msra.mxu0 0.0
    %1645 = vmatprep.subr.mxu0 0.0
    %1646 = vmatpush1.msra.mxu0 0.0
    %1647 = vmatprep.subr.mxu0 0.0
    %1648 = vmatpush1.msra.mxu0 0.0
    %1649 = vmatprep.subr.mxu0 0.0
    %1650 = vmatpush1.msra.mxu0 0.0
    %1651 = vmatprep.subr.mxu0 0.0
    %1652 = vmatpush1.msra.mxu0 0.0
    %1653 = vmatprep.subr.mxu0 0.0
    %1654 = vmatpush1.msra.mxu0 0.0
    %1655 = vmatprep.subr.mxu0 0.0
    %1656 = vmatpush1.msra.mxu0 0.0
    %1657 = vmatprep.subr.mxu0 0.0
    %1658 = vmatpush1.msra.mxu0 0.0
    %1659 = vmatprep.subr.mxu0 0.0
    %1660 = vmatpush1.msra.mxu0 0.0
    %1661 = vmatprep.subr.mxu0 0.0
    %1662 = vmatpush1.msra.mxu0 0.0
    %1663 = vmatprep.subr.mxu0 0.0
    %1664 = vmatpush1.msra.mxu0 0.0
    %1665 = vmatprep.subr.mxu0 0.0
    %1666 = vmatpush1.msra.mxu0 0.0
    %1667 = vmatprep.subr.mxu0 0.0
    %1668 = vmatpush1.msra.mxu0 0.0
    %1669 = vmatprep.mubr.f32.mxu0 0.0
    %1670 = vmatmul.mubr.f32.gmra.mrb[0].mxu0 %v1600
    %v1671 = vpop.f32.mrb[0].mxu0
    %v1672 = vadd.f32 0.0, %v1671
    %v1673 = vpop.f32.mrb[0].mxu0
    %1674 = vmatprep.mubr.f32.mxu0 0.0
    %1675 = vmatmul.mubr.f32.gmra.mrb[0].mxu0 %v1603
    %v1676 = vpop.f32.mrb[0].mxu0
    %v1677 = vadd.f32 0.0, %v1676
    %v1678 = vpop.f32.mrb[0].mxu0
    %1679 = vdwg.mxu0
    %v1681 = vsel %vm223, %v1387, 0
    %v1684 = vsel %vm223, %v1392, 0
    %1686 = vmatprep.subr.mxu0 0.0
    %1687 = vmatpush1.msra.mxu0 %v1189
    %1688 = vmatprep.subr.mxu0 0.0
    %1689 = vmatpush1.msra.mxu0 %v1190
    %1690 = vmatprep.subr.mxu0 0.0
    %1691 = vmatpush1.msra.mxu0 0.0
    %1692 = vmatprep.subr.mxu0 0.0
    %1693 = vmatpush1.msra.mxu0 0.0
    %1694 = vmatprep.subr.mxu0 0.0
    %1695 = vmatpush1.msra.mxu0 0.0
    %1696 = vmatprep.subr.mxu0 0.0
    %1697 = vmatpush1.msra.mxu0 0.0
    %1698 = vmatprep.subr.mxu0 0.0
    %1699 = vmatpush1.msra.mxu0 0.0
    %1700 = vmatprep.subr.mxu0 0.0
    %1701 = vmatpush1.msra.mxu0 0.0
    %1702 = vmatprep.subr.mxu0 0.0
    %1703 = vmatpush1.msra.mxu0 0.0
    %1704 = vmatprep.subr.mxu0 0.0
    %1705 = vmatpush1.msra.mxu0 0.0
    %1706 = vmatprep.subr.mxu0 0.0
    %1707 = vmatpush1.msra.mxu0 0.0
    %1708 = vmatprep.subr.mxu0 0.0
    %1709 = vmatpush1.msra.mxu0 0.0
    %1710 = vmatprep.subr.mxu0 0.0
    %1711 = vmatpush1.msra.mxu0 0.0
    %1712 = vmatprep.subr.mxu0 0.0
    %1713 = vmatpush1.msra.mxu0 0.0
    %1714 = vmatprep.subr.mxu0 0.0
    %1715 = vmatpush1.msra.mxu0 0.0
    %1716 = vmatprep.subr.mxu0 0.0
    %1717 = vmatpush1.msra.mxu0 0.0
    %1718 = vmatprep.subr.mxu0 0.0
    %1719 = vmatpush1.msra.mxu0 0.0
    %1720 = vmatprep.subr.mxu0 0.0
    %1721 = vmatpush1.msra.mxu0 0.0
    %1722 = vmatprep.subr.mxu0 0.0
    %1723 = vmatpush1.msra.mxu0 0.0
    %1724 = vmatprep.subr.mxu0 0.0
    %1725 = vmatpush1.msra.mxu0 0.0
    %1726 = vmatprep.subr.mxu0 0.0
    %1727 = vmatpush1.msra.mxu0 0.0
    %1728 = vmatprep.subr.mxu0 0.0
    %1729 = vmatpush1.msra.mxu0 0.0
    %1730 = vmatprep.subr.mxu0 0.0
    %1731 = vmatpush1.msra.mxu0 0.0
    %1732 = vmatprep.subr.mxu0 0.0
    %1733 = vmatpush1.msra.mxu0 0.0
    %1734 = vmatprep.subr.mxu0 0.0
    %1735 = vmatpush1.msra.mxu0 0.0
    %1736 = vmatprep.subr.mxu0 0.0
    %1737 = vmatpush1.msra.mxu0 0.0
    %1738 = vmatprep.subr.mxu0 0.0
    %1739 = vmatpush1.msra.mxu0 0.0
    %1740 = vmatprep.subr.mxu0 0.0
    %1741 = vmatpush1.msra.mxu0 0.0
    %1742 = vmatprep.subr.mxu0 0.0
    %1743 = vmatpush1.msra.mxu0 0.0
    %1744 = vmatprep.subr.mxu0 0.0
    %1745 = vmatpush1.msra.mxu0 0.0
    %1746 = vmatprep.subr.mxu0 0.0
    %1747 = vmatpush1.msra.mxu0 0.0
    %1748 = vmatprep.subr.mxu0 0.0
    %1749 = vmatpush1.msra.mxu0 0.0
    %1750 = vmatprep.mubr.f32.mxu0 0.0
    %1751 = vmatmul.mubr.f32.gmra.mrb[0].mxu0 %v1681
    %v1752 = vpop.f32.mrb[0].mxu0
    %v1753 = vadd.f32 %v1672, %v1752
    %v1754 = vpop.f32.mrb[0].mxu0
    %1755 = vmatprep.mubr.f32.mxu0 0.0
    %1756 = vmatmul.mubr.f32.gmra.mrb[0].mxu0 %v1684
    %v1757 = vpop.f32.mrb[0].mxu0
    %v1758 = vadd.f32 %v1677, %v1757
    %v1759 = vpop.f32.mrb[0].mxu0
    %1760 = vdwg.mxu0
    %v1761 = vadd.f32 %v1092, %v1753
    %v1762 = vadd.f32 %v1093, %v1758
    %s1763 = scalar_lea.vmem %s8, 1
    %v1764 = vld [vmem:[%s1763] sm:$0x1]
    %v1766 = vlaneseq
    %v1767 = vshrl.u32 %v1766, 7
    %v1768 = vsub.s32 0, %v1767
    %v1769 = vrot.slane %v1764, %v1768
    %v1771 = vadd.f32 %v1761, %v1769
    %v1772 = vadd.f32 %v1762, %v1769
    %s1773 = scalar_lea.vmem %s9, 1
    %v1774 = vld [vmem:[%s1773] sm:$0x1]
    %s1775 = scalar_lea.vmem %s10, 1
    %v1776 = vld [vmem:[%s1775] sm:$0x1]
    %v1777 = vsel %vm75, %v1771, 0.0
    %1778 = vadd.xlane.f32.xlu0 %v1777
    %v1779 = vpop.xlane.xlu0 %1778
    %v1780 = vsel %vm75, %v1772, 0.0
    %1781 = vadd.xlane.f32.xlu0 %v1780
    %v1782 = vpop.xlane.xlu0 %1781
    %v1783 = vmul.f32 %v1779, %v82
    %v1784 = vmul.f32 %v1782, %v82
    %v1785 = vsub.f32 %v1771, %v1783
    %v1786 = vsub.f32 %v1772, %v1784
    %v1787 = vmul.f32 %v1785, %v1785
    %v1788 = vmul.f32 %v1786, %v1786
    %v1789 = vsel %vm75, %v1787, 0.0
    %1790 = vadd.xlane.f32.xlu0 %v1789
    %v1791 = vpop.xlane.xlu0 %1790
    %v1792 = vsel %vm75, %v1788, 0.0
    %1793 = vadd.xlane.f32.xlu0 %v1792
    %v1794 = vpop.xlane.xlu0 %1793
    %v1795 = vmul.f32 %v1791, %v82
    %v1796 = vmul.f32 %v1794, %v82
    %v1797 = vadd.f32 %v1795, 1e-12
    %v1798 = vadd.f32 %v1796, 1e-12
    %v1799 = vrsqrt.pop %v1797
    %v1800 = vrsqrt.pop %v1798
    %v1801 = vmul.f32 %v1785, %v1799
    %v1802 = vmul.f32 %v1786, %v1800
    %v1804 = vlaneseq
    %v1805 = vshrl.u32 %v1804, 7
    %v1806 = vsub.s32 0, %v1805
    %v1807 = vrot.slane %v1774, %v1806
    %v1809 = vmul.f32 %v1801, %v1807
    %v1810 = vmul.f32 %v1802, %v1807
    %v1812 = vlaneseq
    %v1813 = vshrl.u32 %v1812, 7
    %v1814 = vsub.s32 0, %v1813
    %v1815 = vrot.slane %v1776, %v1814
    %v1817 = vadd.f32 %v1809, %v1815
    %v1818 = vadd.f32 %v1810, %v1815
    %s1819 = scalar_lea.vmem %s11, 32
    %v1820 = vld [vmem:[%s1819] sm:$0xff]
    %v1821 = vld [vmem:[%s1819 + $0x8] sm:$0xff]
    %v1822 = vld [vmem:[%s1819 + $0x10] sm:$0xff]
    %v1823 = vld [vmem:[%s1819 + $0x18] sm:$0xff]
    %s1824 = scalar_lea.vmem %s12, 1
    %v1825 = vld [vmem:[%s1824] sm:$0x1]
    %v1827 = vlaneseq
    %v1828 = vshrl.u32 %v1827, 7
    %v1829 = vsub.s32 0, %v1828
    %v1830 = vrot.slane %v1825, %v1829
    %v1833 = vsel %vm75, %v1817, 0
    %v1836 = vsel %vm75, %v1818, 0
    %1838 = vmatprep.subr.mxu0 0.0
    %1839 = vmatpush1.msra.mxu0 %v1820
    %1840 = vmatprep.subr.mxu0 0.0
    %1841 = vmatpush1.msra.mxu0 %v1821
    %1842 = vmatprep.subr.mxu0 0.0
    %1843 = vmatpush1.msra.mxu0 %v1822
    %1844 = vmatprep.subr.mxu0 0.0
    %1845 = vmatpush1.msra.mxu0 %v1823
    %1846 = vmatprep.subr.mxu0 0.0
    %1847 = vmatpush1.msra.mxu0 0.0
    %1848 = vmatprep.subr.mxu0 0.0
    %1849 = vmatpush1.msra.mxu0 0.0
    %1850 = vmatprep.subr.mxu0 0.0
    %1851 = vmatpush1.msra.mxu0 0.0
    %1852 = vmatprep.subr.mxu0 0.0
    %1853 = vmatpush1.msra.mxu0 0.0
    %1854 = vmatprep.subr.mxu0 0.0
    %1855 = vmatpush1.msra.mxu0 0.0
    %1856 = vmatprep.subr.mxu0 0.0
    %1857 = vmatpush1.msra.mxu0 0.0
    %1858 = vmatprep.subr.mxu0 0.0
    %1859 = vmatpush1.msra.mxu0 0.0
    %1860 = vmatprep.subr.mxu0 0.0
    %1861 = vmatpush1.msra.mxu0 0.0
    %1862 = vmatprep.subr.mxu0 0.0
    %1863 = vmatpush1.msra.mxu0 0.0
    %1864 = vmatprep.subr.mxu0 0.0
    %1865 = vmatpush1.msra.mxu0 0.0
    %1866 = vmatprep.subr.mxu0 0.0
    %1867 = vmatpush1.msra.mxu0 0.0
    %1868 = vmatprep.subr.mxu0 0.0
    %1869 = vmatpush1.msra.mxu0 0.0
    %1870 = vmatprep.subr.mxu0 0.0
    %1871 = vmatpush1.msra.mxu0 0.0
    %1872 = vmatprep.subr.mxu0 0.0
    %1873 = vmatpush1.msra.mxu0 0.0
    %1874 = vmatprep.subr.mxu0 0.0
    %1875 = vmatpush1.msra.mxu0 0.0
    %1876 = vmatprep.subr.mxu0 0.0
    %1877 = vmatpush1.msra.mxu0 0.0
    %1878 = vmatprep.subr.mxu0 0.0
    %1879 = vmatpush1.msra.mxu0 0.0
    %1880 = vmatprep.subr.mxu0 0.0
    %1881 = vmatpush1.msra.mxu0 0.0
    %1882 = vmatprep.subr.mxu0 0.0
    %1883 = vmatpush1.msra.mxu0 0.0
    %1884 = vmatprep.subr.mxu0 0.0
    %1885 = vmatpush1.msra.mxu0 0.0
    %1886 = vmatprep.subr.mxu0 0.0
    %1887 = vmatpush1.msra.mxu0 0.0
    %1888 = vmatprep.subr.mxu0 0.0
    %1889 = vmatpush1.msra.mxu0 0.0
    %1890 = vmatprep.subr.mxu0 0.0
    %1891 = vmatpush1.msra.mxu0 0.0
    %1892 = vmatprep.subr.mxu0 0.0
    %1893 = vmatpush1.msra.mxu0 0.0
    %1894 = vmatprep.subr.mxu0 0.0
    %1895 = vmatpush1.msra.mxu0 0.0
    %1896 = vmatprep.subr.mxu0 0.0
    %1897 = vmatpush1.msra.mxu0 0.0
    %1898 = vmatprep.subr.mxu0 0.0
    %1899 = vmatpush1.msra.mxu0 0.0
    %1900 = vmatprep.subr.mxu0 0.0
    %1901 = vmatpush1.msra.mxu0 0.0
    %1902 = vmatprep.mubr.f32.mxu0 0.0
    %1903 = vmatmul.mubr.f32.gmra.mrb[0].mxu0 %v1833
    %v1904 = vpop.f32.mrb[0].mxu0
    %v1905 = vadd.f32 %v1830, %v1904
    %v1906 = vpop.f32.mrb[0].mxu0
    %1907 = vmatprep.mubr.f32.mxu0 0.0
    %1908 = vmatmul.mubr.f32.gmra.mrb[0].mxu0 %v1836
    %v1909 = vpop.f32.mrb[0].mxu0
    %v1910 = vadd.f32 %v1830, %v1909
    %v1911 = vpop.f32.mrb[0].mxu0
    %1912 = vdwg.mxu0
    %v1913 = vmul.f32 %v1905, 0.5
    %v1914 = vmul.f32 %v1910, 0.5
    %v1915 = vmul.f32 %v1905, 0.044715
    %v1916 = vmul.f32 %v1910, 0.044715
    %v1917 = vmul.f32 %v1905, %v1905
    %v1918 = vmul.f32 %v1910, %v1910
    %v1919 = vmul.f32 %v1915, %v1917
    %v1920 = vmul.f32 %v1916, %v1918
    %v1921 = vadd.f32 %v1905, %v1919
    %v1922 = vadd.f32 %v1910, %v1920
    %v1923 = vmul.f32 %v1921, 0.7978846
    %v1924 = vmul.f32 %v1922, 0.7978846
    %v1925 = vtanh.pop %v1923
    %v1926 = vtanh.pop %v1924
    %v1927 = vadd.f32 %v1925, 1.0
    %v1928 = vadd.f32 %v1926, 1.0
    %v1929 = vmul.f32 %v1913, %v1927
    %v1930 = vmul.f32 %v1914, %v1928
    %s1931 = scalar_lea.vmem %s13, 64
    %v1932 = vld [vmem:[%s1931] sm:$0xff]
    %v1933 = vld [vmem:[%s1931 + $0x8] sm:$0xff]
    %v1934 = vld [vmem:[%s1931 + $0x10] sm:$0xff]
    %v1935 = vld [vmem:[%s1931 + $0x18] sm:$0xff]
    %v1936 = vld [vmem:[%s1931 + $0x20] sm:$0xff]
    %v1937 = vld [vmem:[%s1931 + $0x28] sm:$0xff]
    %v1938 = vld [vmem:[%s1931 + $0x30] sm:$0xff]
    %v1939 = vld [vmem:[%s1931 + $0x38] sm:$0xff]
    %s1940 = scalar_lea.vmem %s14, 1
    %v1941 = vld [vmem:[%s1940] sm:$0x1]
    %v1943 = vlaneseq
    %v1944 = vshrl.u32 %v1943, 7
    %v1945 = vsub.s32 0, %v1944
    %v1946 = vrot.slane %v1941, %v1945
    %v1949 = vsel %vm966, %v1929, 0
    %v1952 = vsel %vm966, %v1930, 0
    %1954 = vmatprep.subr.mxu0 0.0
    %1955 = vmatpush1.msra.mxu0 %v1932
    %1956 = vmatprep.subr.mxu0 0.0
    %1957 = vmatpush1.msra.mxu0 %v1933
    %1958 = vmatprep.subr.mxu0 0.0
    %1959 = vmatpush1.msra.mxu0 %v1934
    %1960 = vmatprep.subr.mxu0 0.0
    %1961 = vmatpush1.msra.mxu0 %v1935
    %1962 = vmatprep.subr.mxu0 0.0
    %1963 = vmatpush1.msra.mxu0 %v1936
    %1964 = vmatprep.subr.mxu0 0.0
    %1965 = vmatpush1.msra.mxu0 %v1937
    %1966 = vmatprep.subr.mxu0 0.0
    %1967 = vmatpush1.msra.mxu0 %v1938
    %1968 = vmatprep.subr.mxu0 0.0
    %1969 = vmatpush1.msra.mxu0 %v1939
    %1970 = vmatprep.subr.mxu0 0.0
    %1971 = vmatpush1.msra.mxu0 0.0
    %1972 = vmatprep.subr.mxu0 0.0
    %1973 = vmatpush1.msra.mxu0 0.0
    %1974 = vmatprep.subr.mxu0 0.0
    %1975 = vmatpush1.msra.mxu0 0.0
    %1976 = vmatprep.subr.mxu0 0.0
    %1977 = vmatpush1.msra.mxu0 0.0
    %1978 = vmatprep.subr.mxu0 0.0
    %1979 = vmatpush1.msra.mxu0 0.0
    %1980 = vmatprep.subr.mxu0 0.0
    %1981 = vmatpush1.msra.mxu0 0.0
    %1982 = vmatprep.subr.mxu0 0.0
    %1983 = vmatpush1.msra.mxu0 0.0
    %1984 = vmatprep.subr.mxu0 0.0
    %1985 = vmatpush1.msra.mxu0 0.0
    %1986 = vmatprep.subr.mxu0 0.0
    %1987 = vmatpush1.msra.mxu0 0.0
    %1988 = vmatprep.subr.mxu0 0.0
    %1989 = vmatpush1.msra.mxu0 0.0
    %1990 = vmatprep.subr.mxu0 0.0
    %1991 = vmatpush1.msra.mxu0 0.0
    %1992 = vmatprep.subr.mxu0 0.0
    %1993 = vmatpush1.msra.mxu0 0.0
    %1994 = vmatprep.subr.mxu0 0.0
    %1995 = vmatpush1.msra.mxu0 0.0
    %1996 = vmatprep.subr.mxu0 0.0
    %1997 = vmatpush1.msra.mxu0 0.0
    %1998 = vmatprep.subr.mxu0 0.0
    %1999 = vmatpush1.msra.mxu0 0.0
    %2000 = vmatprep.subr.mxu0 0.0
    %2001 = vmatpush1.msra.mxu0 0.0
    %2002 = vmatprep.subr.mxu0 0.0
    %2003 = vmatpush1.msra.mxu0 0.0
    %2004 = vmatprep.subr.mxu0 0.0
    %2005 = vmatpush1.msra.mxu0 0.0
    %2006 = vmatprep.subr.mxu0 0.0
    %2007 = vmatpush1.msra.mxu0 0.0
    %2008 = vmatprep.subr.mxu0 0.0
    %2009 = vmatpush1.msra.mxu0 0.0
    %2010 = vmatprep.subr.mxu0 0.0
    %2011 = vmatpush1.msra.mxu0 0.0
    %2012 = vmatprep.subr.mxu0 0.0
    %2013 = vmatpush1.msra.mxu0 0.0
    %2014 = vmatprep.subr.mxu0 0.0
    %2015 = vmatpush1.msra.mxu0 0.0
    %2016 = vmatprep.subr.mxu0 0.0
    %2017 = vmatpush1.msra.mxu0 0.0
    %2018 = vmatprep.mubr.f32.mxu0 0.0
    %2019 = vmatmul.mubr.f32.gmra.mrb[0].mxu0 %v1949
    %v2020 = vpop.f32.mrb[0].mxu0
    %v2021 = vadd.f32 %v1946, %v2020
    %v2022 = vpop.f32.mrb[0].mxu0
    %2023 = vmatprep.mubr.f32.mxu0 0.0
    %2024 = vmatmul.mubr.f32.gmra.mrb[0].mxu0 %v1952
    %v2025 = vpop.f32.mrb[0].mxu0
    %v2026 = vadd.f32 %v1946, %v2025
    %v2027 = vpop.f32.mrb[0].mxu0
    %2028 = vdwg.mxu0
    %v2029 = vadd.f32 %v1817, %v2021
    %v2030 = vadd.f32 %v1818, %v2026
    %s2031 = scalar_lea.vmem %s15, 1
    %v2032 = vld [vmem:[%s2031] sm:$0x1]
    %s2033 = scalar_lea.vmem %s16, 1
    %v2034 = vld [vmem:[%s2033] sm:$0x1]
    %v2035 = vsel %vm75, %v2029, 0.0
    %2036 = vadd.xlane.f32.xlu0 %v2035
    %v2037 = vpop.xlane.xlu0 %2036
    %v2038 = vsel %vm75, %v2030, 0.0
    %2039 = vadd.xlane.f32.xlu0 %v2038
    %v2040 = vpop.xlane.xlu0 %2039
    %v2041 = vmul.f32 %v2037, %v82
    %v2042 = vmul.f32 %v2040, %v82
    %v2043 = vsub.f32 %v2029, %v2041
    %v2044 = vsub.f32 %v2030, %v2042
    %v2045 = vmul.f32 %v2043, %v2043
    %v2046 = vmul.f32 %v2044, %v2044
    %v2047 = vsel %vm75, %v2045, 0.0
    %2048 = vadd.xlane.f32.xlu0 %v2047
    %v2049 = vpop.xlane.xlu0 %2048
    %v2050 = vsel %vm75, %v2046, 0.0
    %2051 = vadd.xlane.f32.xlu0 %v2050
    %v2052 = vpop.xlane.xlu0 %2051
    %v2053 = vmul.f32 %v2049, %v82
    %v2054 = vmul.f32 %v2052, %v82
    %v2055 = vadd.f32 %v2053, 1e-12
    %v2056 = vadd.f32 %v2054, 1e-12
    %v2057 = vrsqrt.pop %v2055
    %v2058 = vrsqrt.pop %v2056
    %v2059 = vmul.f32 %v2043, %v2057
    %v2060 = vmul.f32 %v2044, %v2058
    %v2062 = vlaneseq
    %v2063 = vshrl.u32 %v2062, 7
    %v2064 = vsub.s32 0, %v2063
    %v2065 = vrot.slane %v2032, %v2064
    %v2067 = vmul.f32 %v2059, %v2065
    %v2068 = vmul.f32 %v2060, %v2065
    %v2070 = vlaneseq
    %v2071 = vshrl.u32 %v2070, 7
    %v2072 = vsub.s32 0, %v2071
    %v2073 = vrot.slane %v2034, %v2072
    %v2075 = vadd.f32 %v2067, %v2073
    %v2076 = vadd.f32 %v2068, %v2073
    %v2077 = vld [vmem:[%s2] sm:$0x3]
    %v2079 = vsel %vm223, %v2077, 0
    %2081 = vmatprep.subr.mxu0 0.0
    %2082 = vmatpush1.msra.mxu0 %v2075
    %2083 = vmatprep.subr.mxu0 0.0
    %2084 = vmatpush1.msra.mxu0 %v2076
    %2085 = vmatprep.subr.mxu0 0.0
    %2086 = vmatpush1.msra.mxu0 0.0
    %2087 = vmatprep.subr.mxu0 0.0
    %2088 = vmatpush1.msra.mxu0 0.0
    %2089 = vmatprep.subr.mxu0 0.0
    %2090 = vmatpush1.msra.mxu0 0.0
    %2091 = vmatprep.subr.mxu0 0.0
    %2092 = vmatpush1.msra.mxu0 0.0
    %2093 = vmatprep.subr.mxu0 0.0
    %2094 = vmatpush1.msra.mxu0 0.0
    %2095 = vmatprep.subr.mxu0 0.0
    %2096 = vmatpush1.msra.mxu0 0.0
    %2097 = vmatprep.subr.mxu0 0.0
    %2098 = vmatpush1.msra.mxu0 0.0
    %2099 = vmatprep.subr.mxu0 0.0
    %2100 = vmatpush1.msra.mxu0 0.0
    %2101 = vmatprep.subr.mxu0 0.0
    %2102 = vmatpush1.msra.mxu0 0.0
    %2103 = vmatprep.subr.mxu0 0.0
    %2104 = vmatpush1.msra.mxu0 0.0
    %2105 = vmatprep.subr.mxu0 0.0
    %2106 = vmatpush1.msra.mxu0 0.0
    %2107 = vmatprep.subr.mxu0 0.0
    %2108 = vmatpush1.msra.mxu0 0.0
    %2109 = vmatprep.subr.mxu0 0.0
    %2110 = vmatpush1.msra.mxu0 0.0
    %2111 = vmatprep.subr.mxu0 0.0
    %2112 = vmatpush1.msra.mxu0 0.0
    %2113 = vmatprep.subr.mxu0 0.0
    %2114 = vmatpush1.msra.mxu0 0.0
    %2115 = vmatprep.subr.mxu0 0.0
    %2116 = vmatpush1.msra.mxu0 0.0
    %2117 = vmatprep.subr.mxu0 0.0
    %2118 = vmatpush1.msra.mxu0 0.0
    %2119 = vmatprep.subr.mxu0 0.0
    %2120 = vmatpush1.msra.mxu0 0.0
    %2121 = vmatprep.subr.mxu0 0.0
    %2122 = vmatpush1.msra.mxu0 0.0
    %2123 = vmatprep.subr.mxu0 0.0
    %2124 = vmatpush1.msra.mxu0 0.0
    %2125 = vmatprep.subr.mxu0 0.0
    %2126 = vmatpush1.msra.mxu0 0.0
    %2127 = vmatprep.subr.mxu0 0.0
    %2128 = vmatpush1.msra.mxu0 0.0
    %2129 = vmatprep.subr.mxu0 0.0
    %2130 = vmatpush1.msra.mxu0 0.0
    %2131 = vmatprep.subr.mxu0 0.0
    %2132 = vmatpush1.msra.mxu0 0.0
    %2133 = vmatprep.subr.mxu0 0.0
    %2134 = vmatpush1.msra.mxu0 0.0
    %2135 = vmatprep.subr.mxu0 0.0
    %2136 = vmatpush1.msra.mxu0 0.0
    %2137 = vmatprep.subr.mxu0 0.0
    %2138 = vmatpush1.msra.mxu0 0.0
    %2139 = vmatprep.subr.mxu0 0.0
    %2140 = vmatpush1.msra.mxu0 0.0
    %2141 = vmatprep.subr.mxu0 0.0
    %2142 = vmatpush1.msra.mxu0 0.0
    %2143 = vmatprep.subr.mxu0 0.0
    %2144 = vmatpush1.msra.mxu0 0.0
    %2145 = vmatprep.mubr.f32.mxu0 0.0
    %2146 = vmatmul.mubr.f32.gmra.mrb[0].mxu0 %v2079
    %v2147 = vpop.f32.mrb[0].mxu0
    %v2148 = vadd.f32 0.0, %v2147
    %v2149 = vpop.f32.mrb[0].mxu0
    %2150 = vdwg.mxu0
    %v2151 = vld [vmem:[%s17] sm:$0xff]
    %v2152 = vld [vmem:[%s17 + $0x8] sm:$0xff]
    %v2153 = vld [vmem:[%s17 + $0x10] sm:$0xff]
    %v2154 = vld [vmem:[%s17 + $0x18] sm:$0xff]
    %v2155 = vld [vmem:[%s18] sm:$0x1]
    %v2157 = vlaneseq
    %v2158 = vshrl.u32 %v2157, 7
    %v2159 = vsub.s32 0, %v2158
    %v2160 = vrot.slane %v2155, %v2159
    %v2163 = vsel %vm75, %v2148, 0
    %2165 = vmatprep.subr.mxu0 0.0
    %2166 = vmatpush1.msra.mxu0 %v2151
    %2167 = vmatprep.subr.mxu0 0.0
    %2168 = vmatpush1.msra.mxu0 %v2152
    %2169 = vmatprep.subr.mxu0 0.0
    %2170 = vmatpush1.msra.mxu0 %v2153
    %2171 = vmatprep.subr.mxu0 0.0
    %2172 = vmatpush1.msra.mxu0 %v2154
    %2173 = vmatprep.subr.mxu0 0.0
    %2174 = vmatpush1.msra.mxu0 0.0
    %2175 = vmatprep.subr.mxu0 0.0
    %2176 = vmatpush1.msra.mxu0 0.0
    %2177 = vmatprep.subr.mxu0 0.0
    %2178 = vmatpush1.msra.mxu0 0.0
    %2179 = vmatprep.subr.mxu0 0.0
    %2180 = vmatpush1.msra.mxu0 0.0
    %2181 = vmatprep.subr.mxu0 0.0
    %2182 = vmatpush1.msra.mxu0 0.0
    %2183 = vmatprep.subr.mxu0 0.0
    %2184 = vmatpush1.msra.mxu0 0.0
    %2185 = vmatprep.subr.mxu0 0.0
    %2186 = vmatpush1.msra.mxu0 0.0
    %2187 = vmatprep.subr.mxu0 0.0
    %2188 = vmatpush1.msra.mxu0 0.0
    %2189 = vmatprep.subr.mxu0 0.0
    %2190 = vmatpush1.msra.mxu0 0.0
    %2191 = vmatprep.subr.mxu0 0.0
    %2192 = vmatpush1.msra.mxu0 0.0
    %2193 = vmatprep.subr.mxu0 0.0
    %2194 = vmatpush1.msra.mxu0 0.0
    %2195 = vmatprep.subr.mxu0 0.0
    %2196 = vmatpush1.msra.mxu0 0.0
    %2197 = vmatprep.subr.mxu0 0.0
    %2198 = vmatpush1.msra.mxu0 0.0
    %2199 = vmatprep.subr.mxu0 0.0
    %2200 = vmatpush1.msra.mxu0 0.0
    %2201 = vmatprep.subr.mxu0 0.0
    %2202 = vmatpush1.msra.mxu0 0.0
    %2203 = vmatprep.subr.mxu0 0.0
    %2204 = vmatpush1.msra.mxu0 0.0
    %2205 = vmatprep.subr.mxu0 0.0
    %2206 = vmatpush1.msra.mxu0 0.0
    %2207 = vmatprep.subr.mxu0 0.0
    %2208 = vmatpush1.msra.mxu0 0.0
    %2209 = vmatprep.subr.mxu0 0.0
    %2210 = vmatpush1.msra.mxu0 0.0
    %2211 = vmatprep.subr.mxu0 0.0
    %2212 = vmatpush1.msra.mxu0 0.0
    %2213 = vmatprep.subr.mxu0 0.0
    %2214 = vmatpush1.msra.mxu0 0.0
    %2215 = vmatprep.subr.mxu0 0.0
    %2216 = vmatpush1.msra.mxu0 0.0
    %2217 = vmatprep.subr.mxu0 0.0
    %2218 = vmatpush1.msra.mxu0 0.0
    %2219 = vmatprep.subr.mxu0 0.0
    %2220 = vmatpush1.msra.mxu0 0.0
    %2221 = vmatprep.subr.mxu0 0.0
    %2222 = vmatpush1.msra.mxu0 0.0
    %2223 = vmatprep.subr.mxu0 0.0
    %2224 = vmatpush1.msra.mxu0 0.0
    %2225 = vmatprep.subr.mxu0 0.0
    %2226 = vmatpush1.msra.mxu0 0.0
    %2227 = vmatprep.subr.mxu0 0.0
    %2228 = vmatpush1.msra.mxu0 0.0
    %2229 = vmatprep.mubr.f32.mxu0 0.0
    %2230 = vmatmul.mubr.f32.gmra.mrb[0].mxu0 %v2163
    %v2231 = vpop.f32.mrb[0].mxu0
    %v2232 = vadd.f32 %v2160, %v2231
    %v2233 = vpop.f32.mrb[0].mxu0
    %2234 = vdwg.mxu0
    %v2235 = vtanh.pop %v2232
    %v2236 = vld [vmem:[%s19] sm:$0xff]
    %v2237 = vld [vmem:[%s19 + $0x8] sm:$0xff]
    %v2238 = vld [vmem:[%s19 + $0x10] sm:$0xff]
    %v2239 = vld [vmem:[%s19 + $0x18] sm:$0xff]
    %v2240 = vld [vmem:[#allocation2] sm:$0x1]
    %v2242 = vlaneseq
    %v2243 = vshrl.u32 %v2242, 7
    %v2244 = vsub.s32 0, %v2243
    %v2245 = vrot.slane %v2240, %v2244
    %v2248 = vsel %vm75, %v2235, 0
    %2250 = vmatprep.subr.mxu0 0.0
    %2251 = vmatpush1.msra.mxu0 %v2236
    %2252 = vmatprep.subr.mxu0 0.0
    %2253 = vmatpush1.msra.mxu0 %v2237
    %2254 = vmatprep.subr.mxu0 0.0
    %2255 = vmatpush1.msra.mxu0 %v2238
    %2256 = vmatprep.subr.mxu0 0.0
    %2257 = vmatpush1.msra.mxu0 %v2239
    %2258 = vmatprep.subr.mxu0 0.0
    %2259 = vmatpush1.msra.mxu0 0.0
    %2260 = vmatprep.subr.mxu0 0.0
    %2261 = vmatpush1.msra.mxu0 0.0
    %2262 = vmatprep.subr.mxu0 0.0
    %2263 = vmatpush1.msra.mxu0 0.0
    %2264 = vmatprep.subr.mxu0 0.0
    %2265 = vmatpush1.msra.mxu0 0.0
    %2266 = vmatprep.subr.mxu0 0.0
    %2267 = vmatpush1.msra.mxu0 0.0
    %2268 = vmatprep.subr.mxu0 0.0
    %2269 = vmatpush1.msra.mxu0 0.0
    %2270 = vmatprep.subr.mxu0 0.0
    %2271 = vmatpush1.msra.mxu0 0.0
    %2272 = vmatprep.subr.mxu0 0.0
    %2273 = vmatpush1.msra.mxu0 0.0
    %2274 = vmatprep.subr.mxu0 0.0
    %2275 = vmatpush1.msra.mxu0 0.0
    %2276 = vmatprep.subr.mxu0 0.0
    %2277 = vmatpush1.msra.mxu0 0.0
    %2278 = vmatprep.subr.mxu0 0.0
    %2279 = vmatpush1.msra.mxu0 0.0
    %2280 = vmatprep.subr.mxu0 0.0
    %2281 = vmatpush1.msra.mxu0 0.0
    %2282 = vmatprep.subr.mxu0 0.0
    %2283 = vmatpush1.msra.mxu0 0.0
    %2284 = vmatprep.subr.mxu0 0.0
    %2285 = vmatpush1.msra.mxu0 0.0
    %2286 = vmatprep.subr.mxu0 0.0
    %2287 = vmatpush1.msra.mxu0 0.0
    %2288 = vmatprep.subr.mxu0 0.0
    %2289 = vmatpush1.msra.mxu0 0.0
    %2290 = vmatprep.subr.mxu0 0.0
    %2291 = vmatpush1.msra.mxu0 0.0
    %2292 = vmatprep.subr.mxu0 0.0
    %2293 = vmatpush1.msra.mxu0 0.0
    %2294 = vmatprep.subr.mxu0 0.0
    %2295 = vmatpush1.msra.mxu0 0.0
    %2296 = vmatprep.subr.mxu0 0.0
    %2297 = vmatpush1.msra.mxu0 0.0
    %2298 = vmatprep.subr.mxu0 0.0
    %2299 = vmatpush1.msra.mxu0 0.0
    %2300 = vmatprep.subr.mxu0 0.0
    %2301 = vmatpush1.msra.mxu0 0.0
    %2302 = vmatprep.subr.mxu0 0.0
    %2303 = vmatpush1.msra.mxu0 0.0
    %2304 = vmatprep.subr.mxu0 0.0
    %2305 = vmatpush1.msra.mxu0 0.0
    %2306 = vmatprep.subr.mxu0 0.0
    %2307 = vmatpush1.msra.mxu0 0.0
    %2308 = vmatprep.subr.mxu0 0.0
    %2309 = vmatpush1.msra.mxu0 0.0
    %2310 = vmatprep.subr.mxu0 0.0
    %2311 = vmatpush1.msra.mxu0 0.0
    %2312 = vmatprep.subr.mxu0 0.0
    %2313 = vmatpush1.msra.mxu0 0.0
    %2314 = vmatprep.mubr.f32.mxu0 0.0
    %2315 = vmatmul.mubr.f32.gmra.mrb[0].mxu0 %v2248
    %v2316 = vpop.f32.mrb[0].mxu0
    %v2317 = vadd.f32 %v2245, %v2316
    %v2318 = vpop.f32.mrb[0].mxu0
    %2319 = vdwg.mxu0
    %vm2320 = vcmask 1024
    %v2321 = vsel %vm2320, %v2317, -inf
    %v2322 = vrot.slane %v2321, 4
    %v2323 = vmax.f32 %v2321, %v2322
    %v2324 = vrot.slane %v2323, 2
    %v2325 = vmax.f32 %v2323, %v2324
    %v2326 = vrot.slane %v2325, 1
    %v2327 = vmax.f32 %v2325, %v2326
    %v2328 = vsub.f32 %v2317, %v2327
    %v2329 = vmul.f32 %v2328, 1.442695
    %v2330 = vpow.pop %v2329
    %v2331 = vsel %vm2320, %v2330, 0.0
    %v2332 = vrot.slane %v2331, 4
    %v2333 = vadd.f32 %v2331, %v2332
    %v2334 = vrot.slane %v2333, 2
    %v2335 = vadd.f32 %v2333, %v2334
    %v2336 = vrot.slane %v2335, 1
    %v2337 = vadd.f32 %v2335, %v2336
    %v2338 = vlog2.pop %v2337
    %v2339 = vmul.f32 %v2338, 0.6931472
    %v2340 = vadd.f32 %v2339, %v2327
    %v2341 = vsub.f32 %v2340, %v2317
    %vm2342 = vcmask 0
    %2343 = vst.msk [vmem:[#allocation3] sm:$0x1] %vm2342, %v2341
    // Predicated region
    $region86: #{cross_encoder_loss.1} parent=1 // pred_check
      _
    $region87: #{cross_encoder_loss.1} parent=1 // pred_check_branch
      %2345 = sbr.rel (0) target = $region89
    $region88: #{cross_encoder_loss.1} parent=1 // pred_region
      %s2347 = ssub.s32 16, 16
      %2348 = vsyncadd [#allocation4], %s2347
      %s2350 = sshll.u32 [#allocation3], 4
      %s2351 = int_to_ptr.vmem [resolvable:$true] %s2350
      %2353 = dma.vmem_to_hbm [thread:$0]  %s2351, 16, %s21, [#allocation4]
    $region89: #{cross_encoder_loss.1} parent=1 // pred_fallthru
      _
    // Predicated region
    $region90: #{cross_encoder_loss.1} parent=1 // pred_check
      _
    $region91: #{cross_encoder_loss.1} parent=1 // pred_check_branch
      %2355 = sbr.rel (0) target = $region93
    $region92: #{cross_encoder_loss.1} parent=1 // pred_region
      %2356 = dma.done [#allocation4], 16
    $region93: #{cross_encoder_loss.1} parent=1 // pred_fallthru
      _
    %2357 = vsyncpa [#allocation4], 1

</llo_original>
